<compile_context>
chip_gen: v7x
topology: tpu7x:2x2x1
jax: 0.10.0
libtpu: 0.0.40
codegen_flags: <defaults>
</compile_context>

<pallas_src>
import numpy as np
import jax
import jax.numpy as jnp
from jax import lax
from jax.experimental import pallas as pl
from jax.experimental.pallas import tpu as pltpu

# ---------------- config (consistent with T5Block + lucidrains MoE) ----------
B, N = 2, 8                 # batch, sequence length
D_MODEL = 32                # config.d_model
D_FF = 64                   # config.d_ff (expert hidden dim)
N_HEADS = 4                 # config.num_heads
D_KV = 8                    # config.d_kv
INNER = N_HEADS * D_KV      # T5 attention inner dim (= 32)
NUM_EXPERTS = 16
EPS_LN = 1e-6               # T5LayerNorm eps
LOSS_COEF = 0.01
MIN_EXPERT_CAPACITY = 4
CAPACITY_FACTOR_EVAL = 2.0
SECOND_THRESHOLD_EVAL = 0.2
GATE_EPS = 1e-9

T = B * N                                                         # 16 tokens
HT = N_HEADS * T                                                  # 64 stacked rows
EF = NUM_EXPERTS * D_FF                                           # 1024 stacked FFN lanes
CAPACITY = max(min(N, int(N * CAPACITY_FACTOR_EVAL / NUM_EXPERTS)),
               MIN_EXPERT_CAPACITY)                                # = 4
NEG_BIG = -1e30


def _rms_norm(x, w):
    var = jnp.mean(x * x, axis=-1, keepdims=True)
    return x * lax.rsqrt(var + EPS_LN) * w


# ============================ fused Pallas kernel =============================

def _fused_moe_t5_block_kernel(
    x_ref, probs_ref, ln0_ref, wqkv_ref, wo_ref, ln1_ref, wg_ref,
    w1s_ref, w2s_ref, bias_ref, hlm_ref, tri_ref, bfull_ref, bsel_ref, rep_ref,
    out_ref, loss_ref,
):
    f32 = jnp.float32
    bf16 = jnp.bfloat16
    E = NUM_EXPERTS
    x = x_ref[...]                                                 # (T, D)

    # ---------------- T5LayerSelfAttention (heads stacked on sublanes) -------
    xn0 = _rms_norm(x, ln0_ref[...])                               # (T, D), f32

    # fused QKV projection: one lane-dense (16,32)@(32,96) bf16 matmul
    qkv = jnp.dot(xn0.astype(bf16), wqkv_ref[...],
                  preferred_element_type=f32)                      # (T, 3*INNER)
    q = qkv[:, 0:INNER]                                            # (T, INNER)
    k = qkv[:, INNER:2 * INNER]
    v = qkv[:, 2 * INNER:3 * INNER]

    # K/V tiled over heads along sublanes and masked to each head's lane block;
    # row r = h*T + t of ks holds k[t] restricted to head h's 8 lanes.
    hlm = hlm_ref[...]                                             # (HT, INNER) const
    ks = jnp.concatenate([k] * N_HEADS, axis=0) * hlm              # (HT, INNER)
    vs = jnp.concatenate([v] * N_HEADS, axis=0) * hlm              # (HT, INNER)

    # scores for all heads in one matmul: s_small[t, h*T+t'] = q_h[t] . k_h[t']
    s_small = lax.dot_general(q.astype(bf16), ks.astype(bf16),
                              (((1,), (1,)), ((), ())),
                              preferred_element_type=f32)          # (T, HT)
    s = jnp.concatenate([s_small] * N_HEADS, axis=0) + bias_ref[...]   # (HT, HT)

    # single softmax over all (head, token) rows; cross-head/cross-batch entries
    # carry -1e30 bias -> exactly 0 after exp.  (T5: no 1/sqrt(d) scaling.)
    m = jnp.max(s, axis=-1, keepdims=True)
    p = jnp.exp(s - m)
    w_attn = p / jnp.sum(p, axis=-1, keepdims=True)                # (HT, HT)

    pv = jnp.dot(w_attn.astype(bf16), vs.astype(bf16),
                 preferred_element_type=f32)                       # (HT, INNER)
    # per-head contexts live in disjoint lane blocks -> summing the 4 head slabs
    # reassembles the standard (T, INNER) context layout.
    ctx = pv[0:T] + pv[T:2 * T] + pv[2 * T:3 * T] + pv[3 * T:4 * T]    # (T, INNER)

    attn_out = jnp.dot(ctx.astype(bf16), wo_ref[...],
                       preferred_element_type=f32)                 # (T, D)
    hidden = x + attn_out                                          # residual (dropout=id)

    # ---------------- layer[1].layer_norm + MoE gate (kept in f32) -----------
    xn1 = _rms_norm(hidden, ln1_ref[...])                          # (T, D)
    logits = jnp.dot(xn1, wg_ref[...], preferred_element_type=f32) # (T, E)
    lm = jnp.max(logits, axis=-1, keepdims=True)
    le = jnp.exp(logits - lm)
    gates = le / jnp.sum(le, axis=-1, keepdims=True)               # raw_gates (T, E)

    # ---------------- Top2Gating (eval: 'random' policy, cap factor 2.0) ------
    e_iota = lax.broadcasted_iota(jnp.int32, (T, E), 1).astype(f32)

    gate1 = jnp.max(gates, axis=-1, keepdims=True)                 # (T, 1)
    idx1 = jnp.min(jnp.where(gates == gate1, e_iota, float(E)),
                   axis=-1, keepdims=True)                         # first argmax
    mask1_oh = (e_iota == idx1).astype(f32)                        # (T, E)

    gates_wo1 = gates * (1.0 - mask1_oh)
    gate2 = jnp.max(gates_wo1, axis=-1, keepdims=True)
    idx2 = jnp.min(jnp.where(gates_wo1 == gate2, e_iota, float(E)),
                   axis=-1, keepdims=True)
    mask2_oh = (e_iota == idx2).astype(f32)

    denom = gate1 + gate2 + GATE_EPS
    gate1n = gate1 / denom
    gate2n = gate2 / denom

    # balancing loss (pre-capacity top-1 mask & raw gates, per-batch means)
    density1 = jnp.dot(bsel_ref[...], mask1_oh, preferred_element_type=f32) * (1.0 / N)
    densityp = jnp.dot(bsel_ref[...], gates, preferred_element_type=f32) * (1.0 / N)
    lsum = jnp.sum(density1 * densityp, axis=-1, keepdims=True)    # (B, 1)
    loss_ref[...] = (jnp.sum(lsum, axis=0, keepdims=True)
                     * (float(E * E) / float(B * E)))

    # 'random' second-expert drop (uniform probs passed in from the wrapper)
    thr = max(SECOND_THRESHOLD_EVAL, GATE_EPS)
    keep2 = (probs_ref[...] < gate2n * (1.0 / thr)).astype(f32)    # (T, 1)
    mask2 = mask2_oh * keep2

    # per-batch exclusive cumsum over tokens via constant strictly-lower-tri matmul
    capf = float(CAPACITY)
    tri = tri_ref[...]                                             # (T, T) const
    bfull = bfull_ref[...]                                         # (T, T) const
    pos1 = jnp.dot(tri, mask1_oh, preferred_element_type=f32) * mask1_oh
    mask1 = mask1_oh * (pos1 < capf).astype(f32)                   # post-capacity top-1
    m1cnt = jnp.dot(bfull, mask1, preferred_element_type=f32)      # per-batch count
    pos2 = (jnp.dot(tri, mask2, preferred_element_type=f32) + m1cnt) * mask2
    mask2c = mask2 * (pos2 < capf).astype(f32)                     # post-capacity top-2

    # dense per-expert gate weight (post-capacity masks already encode drops)
    gate_w = gate1n * mask1 + gate2n * mask2c                      # (T, E)
    # broadcast each expert's weight over its D_FF lane block (const one-hot matmul)
    gate_mask = jnp.dot(gate_w, rep_ref[...], preferred_element_type=f32)  # (T, EF)

    # ---------------- all-expert FFN: two lane-dense matmuls ------------------
    h1 = jnp.maximum(jnp.dot(xn1.astype(bf16), w1s_ref[...],
                             preferred_element_type=f32), 0.0)     # (T, EF)
    hm = (h1 * gate_mask).astype(bf16)
    moe_out = jnp.dot(hm, w2s_ref[...], preferred_element_type=f32)  # (T, D)

    out_ref[...] = hidden + moe_out                                # layer[1] residual


# ============================ pallas_call wrapper =============================

def fused_moe_t5_block(xf, probs, ln0, wqkv, wo, ln1, wg, w1s, w2s,
                       attn_bias, hl_mask, tri, bfull, bsel, rep):
    def full(shape):
        return pl.BlockSpec(shape, lambda i, _n=len(shape): (0,) * _n)

    return pl.pallas_call(
        _fused_moe_t5_block_kernel,
        out_shape=(jax.ShapeDtypeStruct((T, D_MODEL), jnp.float32),
                   jax.ShapeDtypeStruct((1, 1), jnp.float32)),
        grid=(1,),
        in_specs=[
            full((T, D_MODEL)),          # x (flattened tokens)
            full((T, 1)),                # uniform probs for random 2nd-expert drop
            full((1, D_MODEL)),          # attn layer_norm weight
            full((D_MODEL, 3 * INNER)),  # fused QKV weight (bf16)
            full((INNER, D_MODEL)),      # output projection (bf16)
            full((1, D_MODEL)),          # FF layer_norm weight
            full((D_MODEL, NUM_EXPERTS)),        # gate (f32)
            full((D_MODEL, EF)),         # experts W1 stacked along lanes (bf16)
            full((EF, D_MODEL)),         # experts W2 stacked along rows (bf16)
            full((HT, HT)),              # const: head+batch additive attention bias
            full((HT, INNER)),           # const: head lane mask
            full((T, T)),                # const: same-batch strictly-lower tri
            full((T, T)),                # const: same-batch all-ones
            full((B, T)),                # const: batch selector (loss means)
            full((NUM_EXPERTS, EF)),     # const: expert block one-hot
        ],
        out_specs=[full((T, D_MODEL)), full((1, 1))],
        compiler_params=pltpu.CompilerParams(dimension_semantics=("arbitrary",)),
    )(xf, probs, ln0, wqkv, wo, ln1, wg, w1s, w2s,
      attn_bias, hl_mask, tri, bfull, bsel, rep)


# ============================ constants (hoisted host-side) ===================

def _build_constants():
    r = np.arange(HT)
    h_of = r // T
    b_of = (r % T) // N
    same_blk = (h_of[:, None] == h_of[None, :]) & (b_of[:, None] == b_of[None, :])
    attn_bias = np.where(same_blk, 0.0, NEG_BIG).astype(np.float32)        # (HT, HT)

    j = np.arange(INNER)
    hl_mask = (j[None, :] // D_KV == h_of[:, None]).astype(np.float32)     # (HT, INNER)

    t = np.arange(T)
    same_b = (t[:, None] // N) == (t[None, :] // N)
    tri = (same_b & (t[None, :] < t[:, None])).astype(np.float32)          # (T, T)
    bfull = same_b.astype(np.float32)                                      # (T, T)
    bsel = (t[None, :] // N == np.arange(B)[:, None]).astype(np.float32)   # (B, T)

    col = np.arange(EF)
    rep = (col[None, :] // D_FF == np.arange(NUM_EXPERTS)[:, None]).astype(np.float32)

    return tuple(jnp.asarray(a) for a in (attn_bias, hl_mask, tri, bfull, bsel, rep))


_CONSTS = _build_constants()


# ============================ full forward ====================================

def init_params(key):
    ks = jax.random.split(key, 8)
    return {
        "ln0": jnp.ones((1, D_MODEL), jnp.float32),                # attn layer_norm
        "wq": 0.05 * jax.random.normal(ks[0], (D_MODEL, INNER), jnp.float32),
        "wk": 0.05 * jax.random.normal(ks[1], (D_MODEL, INNER), jnp.float32),
        "wv": 0.05 * jax.random.normal(ks[2], (D_MODEL, INNER), jnp.float32),
        "wo": 0.05 * jax.random.normal(ks[3], (INNER, D_MODEL), jnp.float32),
        "ln1": jnp.ones((1, D_MODEL), jnp.float32),                # FF layer_norm
        "wg": jax.random.normal(ks[4], (D_MODEL, NUM_EXPERTS), jnp.float32),
        "w1": 0.02 * jax.random.normal(ks[5], (NUM_EXPERTS, D_MODEL, D_FF), jnp.float32),
        "w2": 0.02 * jax.random.normal(ks[6], (NUM_EXPERTS, D_FF, D_MODEL), jnp.float32),
    }


def moe_t5_block_forward(params, hidden_states, attention_mask=None, gate_key=None):
    # TODO(synk): extended additive attention_mask / relative position bias not
    # plumbed into the kernel; demo calls with attention_mask=None (zero bias).
    del attention_mask
    if gate_key is None:
        gate_key = jax.random.PRNGKey(1)

    xf = hidden_states.reshape(T, D_MODEL)

    # layout plumbing only: fuse QKV, stack expert weights along lanes, cast bf16
    wqkv = jnp.concatenate([params["wq"], params["wk"], params["wv"]],
                           axis=1).astype(jnp.bfloat16)            # (D, 3*INNER)
    wo = params["wo"].astype(jnp.bfloat16)                         # (INNER, D)
    w1s = jnp.transpose(params["w1"], (1, 0, 2)).reshape(D_MODEL, EF).astype(jnp.bfloat16)
    w2s = params["w2"].reshape(EF, D_MODEL).astype(jnp.bfloat16)

    # TODO(synk): 'random' second-expert drop uses a JAX PRNG stream, not torch's.
    probs = jax.random.uniform(gate_key, (B, N), dtype=jnp.float32).reshape(T, 1)

    out_flat, loss11 = fused_moe_t5_block(
        xf, probs, params["ln0"], wqkv, wo, params["ln1"], params["wg"],
        w1s, w2s, *_CONSTS)

    layer_output = out_flat.reshape(B, N, D_MODEL)
    moe_loss = loss11[0, 0] * LOSS_COEF
    # mirrors `(layer_output,) + layer_output[1:] + (moe_loss,)` of the reference
    return (layer_output, layer_output[1:], moe_loss)


if __name__ == "__main__":
    key = jax.random.PRNGKey(0)
    k_x, k_p = jax.random.split(key)
    params = init_params(k_p)
    x = jax.random.normal(k_x, (B, N, D_MODEL), jnp.float32)

    outputs = moe_t5_block_forward(params, x, attention_mask=None)
    layer_output, tail, moe_loss = outputs
    jax.block_until_ready(layer_output)
    jax.block_until_ready(tail)
    jax.block_until_ready(moe_loss)
    assert layer_output.shape == (B, N, D_MODEL)
    assert tail.shape == (B - 1, N, D_MODEL)
    assert moe_loss.shape == ()
    print("KERNEL_OK")
</pallas_src>

<mosaic_0001>
module attributes {stable_mosaic.version = 11 : i64} {
  func.func @_fused_moe_t5_block_kernel(%arg0: i32, %arg1: memref<16x32xf32, #tpu.memory_space<vmem>>, %arg2: memref<16x1xf32, #tpu.memory_space<vmem>>, %arg3: memref<1x32xf32, #tpu.memory_space<vmem>>, %arg4: memref<32x96xbf16, #tpu.memory_space<vmem>>, %arg5: memref<32x32xbf16, #tpu.memory_space<vmem>>, %arg6: memref<1x32xf32, #tpu.memory_space<vmem>>, %arg7: memref<32x16xf32, #tpu.memory_space<vmem>>, %arg8: memref<32x1024xbf16, #tpu.memory_space<vmem>>, %arg9: memref<1024x32xbf16, #tpu.memory_space<vmem>>, %arg10: memref<64x64xf32, #tpu.memory_space<vmem>>, %arg11: memref<64x32xf32, #tpu.memory_space<vmem>>, %arg12: memref<16x16xf32, #tpu.memory_space<vmem>>, %arg13: memref<16x16xf32, #tpu.memory_space<vmem>>, %arg14: memref<2x16xf32, #tpu.memory_space<vmem>>, %arg15: memref<16x1024xf32, #tpu.memory_space<vmem>>, %arg16: memref<16x32xf32, #tpu.memory_space<vmem>>, %arg17: memref<1x1xf32, #tpu.memory_space<vmem>>) attributes {dimension_semantics = [#tpu.dimension_semantics<arbitrary>], iteration_bounds = array<i64: 1>, scalar_prefetch = 0 : i64, scratch_operands = 0 : i64, tpu.core_type = #tpu.core_type<tc>, window_params = [{pipeline_mode = #tpu.pipeline_mode<synchronous>, transform_indices = @transform_0, window_bounds = array<i64: 16, 32>}, {pipeline_mode = #tpu.pipeline_mode<synchronous>, transform_indices = @transform_1, window_bounds = array<i64: 16, 1>}, {pipeline_mode = #tpu.pipeline_mode<synchronous>, transform_indices = @transform_2, window_bounds = array<i64: 1, 32>}, {pipeline_mode = #tpu.pipeline_mode<synchronous>, transform_indices = @transform_3, window_bounds = array<i64: 32, 96>}, {pipeline_mode = #tpu.pipeline_mode<synchronous>, transform_indices = @transform_4, window_bounds = array<i64: 32, 32>}, {pipeline_mode = #tpu.pipeline_mode<synchronous>, transform_indices = @transform_5, window_bounds = array<i64: 1, 32>}, {pipeline_mode = #tpu.pipeline_mode<synchronous>, transform_indices = @transform_6, window_bounds = array<i64: 32, 16>}, {pipeline_mode = #tpu.pipeline_mode<synchronous>, transform_indices = @transform_7, window_bounds = array<i64: 32, 1024>}, {pipeline_mode = #tpu.pipeline_mode<synchronous>, transform_indices = @transform_8, window_bounds = array<i64: 1024, 32>}, {pipeline_mode = #tpu.pipeline_mode<synchronous>, transform_indices = @transform_9, window_bounds = array<i64: 64, 64>}, {pipeline_mode = #tpu.pipeline_mode<synchronous>, transform_indices = @transform_10, window_bounds = array<i64: 64, 32>}, {pipeline_mode = #tpu.pipeline_mode<synchronous>, transform_indices = @transform_11, window_bounds = array<i64: 16, 16>}, {pipeline_mode = #tpu.pipeline_mode<synchronous>, transform_indices = @transform_12, window_bounds = array<i64: 16, 16>}, {pipeline_mode = #tpu.pipeline_mode<synchronous>, transform_indices = @transform_13, window_bounds = array<i64: 2, 16>}, {pipeline_mode = #tpu.pipeline_mode<synchronous>, transform_indices = @transform_14, window_bounds = array<i64: 16, 1024>}, {pipeline_mode = #tpu.pipeline_mode<synchronous>, transform_indices = @transform_15, window_bounds = array<i64: 16, 32>}, {pipeline_mode = #tpu.pipeline_mode<synchronous>, transform_indices = @transform_16, window_bounds = array<i64: 1, 1>}]} {
    %c0 = arith.constant 0 : index
    %c0_0 = arith.constant 0 : index
    %0 = vector.load %arg1[%c0, %c0_0] : memref<16x32xf32, #tpu.memory_space<vmem>>, vector<16x32xf32>
    %c0_1 = arith.constant 0 : index
    %c0_2 = arith.constant 0 : index
    %1 = vector.load %arg3[%c0_1, %c0_2] : memref<1x32xf32, #tpu.memory_space<vmem>>, vector<1x32xf32>
    %2 = arith.mulf %0, %0 : vector<16x32xf32>
    %cst = arith.constant dense<0.000000e+00> : vector<16xf32>
    %3 = vector.multi_reduction <add>, %2, %cst [1] : vector<16x32xf32> to vector<16xf32>
    %4 = vector.shape_cast %3 : vector<16xf32> to vector<16x1xf32>
    %cst_3 = arith.constant 3.200000e+01 : f32
    %5 = vector.broadcast %cst_3 : f32 to vector<16x1xf32>
    %6 = arith.divf %4, %5 : vector<16x1xf32>
    %cst_4 = arith.constant 9.99999997E-7 : f32
    %7 = vector.broadcast %cst_4 : f32 to vector<16x1xf32>
    %8 = arith.addf %6, %7 : vector<16x1xf32>
    %9 = math.rsqrt %8 : vector<16x1xf32>
    %10 = vector.broadcast %9 : vector<16x1xf32> to vector<16x32xf32>
    %11 = arith.mulf %0, %10 : vector<16x32xf32>
    %12 = vector.broadcast %1 : vector<1x32xf32> to vector<16x32xf32>
    %13 = arith.mulf %11, %12 : vector<16x32xf32>
    %14 = arith.truncf %13 : vector<16x32xf32> to vector<16x32xbf16>
    %c0_5 = arith.constant 0 : index
    %c0_6 = arith.constant 0 : index
    %15 = vector.load %arg4[%c0_5, %c0_6] : memref<32x96xbf16, #tpu.memory_space<vmem>>, vector<32x96xbf16>
    %cst_7 = arith.constant dense<0.000000e+00> : vector<16x96xf32>
    %16 = tpu.matmul %14, %15, %cst_7 {dimension_numbers = #tpu.dot_dimension_numbers<[1], [0], [0], [1], [0, 0, 1, 1], [], []>} : vector<16x32xbf16>, vector<32x96xbf16>, vector<16x96xf32> -> vector<16x96xf32>
    %17 = vector.extract_strided_slice %16 {offsets = [0, 0], sizes = [16, 32], strides = [1, 1]} : vector<16x96xf32> to vector<16x32xf32>
    %18 = vector.extract_strided_slice %16 {offsets = [0, 32], sizes = [16, 32], strides = [1, 1]} : vector<16x96xf32> to vector<16x32xf32>
    %19 = vector.extract_strided_slice %16 {offsets = [0, 64], sizes = [16, 32], strides = [1, 1]} : vector<16x96xf32> to vector<16x32xf32>
    %c0_8 = arith.constant 0 : index
    %c0_9 = arith.constant 0 : index
    %20 = vector.load %arg11[%c0_8, %c0_9] : memref<64x32xf32, #tpu.memory_space<vmem>>, vector<64x32xf32>
    %21 = tpu.concatenate %18, %18, %18, %18 in 0 : vector<16x32xf32>, vector<16x32xf32>, vector<16x32xf32>, vector<16x32xf32> -> vector<64x32xf32>
    %22 = arith.mulf %21, %20 : vector<64x32xf32>
    %23 = tpu.concatenate %19, %19, %19, %19 in 0 : vector<16x32xf32>, vector<16x32xf32>, vector<16x32xf32>, vector<16x32xf32> -> vector<64x32xf32>
    %24 = arith.mulf %23, %20 : vector<64x32xf32>
    %25 = arith.truncf %17 : vector<16x32xf32> to vector<16x32xbf16>
    %26 = arith.truncf %22 : vector<64x32xf32> to vector<64x32xbf16>
    %cst_10 = arith.constant dense<0.000000e+00> : vector<16x64xf32>
    %27 = tpu.matmul %25, %26, %cst_10 {dimension_numbers = #tpu.dot_dimension_numbers<[1], [1], [0], [0], [0, 0, 1, 0], [], []>} : vector<16x32xbf16>, vector<64x32xbf16>, vector<16x64xf32> -> vector<16x64xf32>
    %28 = tpu.concatenate %27, %27, %27, %27 in 0 : vector<16x64xf32>, vector<16x64xf32>, vector<16x64xf32>, vector<16x64xf32> -> vector<64x64xf32>
    %c0_11 = arith.constant 0 : index
    %c0_12 = arith.constant 0 : index
    %29 = vector.load %arg10[%c0_11, %c0_12] : memref<64x64xf32, #tpu.memory_space<vmem>>, vector<64x64xf32>
    %30 = arith.addf %28, %29 : vector<64x64xf32>
    %cst_13 = arith.constant dense<0xFF800000> : vector<64xf32>
    %31 = vector.multi_reduction <maximumf>, %30, %cst_13 [1] : vector<64x64xf32> to vector<64xf32>
    %32 = vector.shape_cast %31 : vector<64xf32> to vector<64x1xf32>
    %33 = vector.broadcast %32 : vector<64x1xf32> to vector<64x64xf32>
    %34 = arith.subf %30, %33 : vector<64x64xf32>
    %35 = math.exp %34 : vector<64x64xf32>
    %cst_14 = arith.constant dense<0.000000e+00> : vector<64xf32>
    %36 = vector.multi_reduction <add>, %35, %cst_14 [1] : vector<64x64xf32> to vector<64xf32>
    %37 = vector.shape_cast %36 : vector<64xf32> to vector<64x1xf32>
    %38 = vector.broadcast %37 : vector<64x1xf32> to vector<64x64xf32>
    %39 = arith.divf %35, %38 : vector<64x64xf32>
    %40 = arith.truncf %39 : vector<64x64xf32> to vector<64x64xbf16>
    %41 = arith.truncf %24 : vector<64x32xf32> to vector<64x32xbf16>
    %cst_15 = arith.constant dense<0.000000e+00> : vector<64x32xf32>
    %42 = tpu.matmul %40, %41, %cst_15 {dimension_numbers = #tpu.dot_dimension_numbers<[1], [0], [0], [1], [0, 0, 1, 1], [], []>} : vector<64x64xbf16>, vector<64x32xbf16>, vector<64x32xf32> -> vector<64x32xf32>
    %43 = vector.extract_strided_slice %42 {offsets = [0, 0], sizes = [16, 32], strides = [1, 1]} : vector<64x32xf32> to vector<16x32xf32>
    %44 = vector.extract_strided_slice %42 {offsets = [16, 0], sizes = [16, 32], strides = [1, 1]} : vector<64x32xf32> to vector<16x32xf32>
    %45 = arith.addf %43, %44 : vector<16x32xf32>
    %46 = vector.extract_strided_slice %42 {offsets = [32, 0], sizes = [16, 32], strides = [1, 1]} : vector<64x32xf32> to vector<16x32xf32>
    %47 = arith.addf %45, %46 : vector<16x32xf32>
    %48 = vector.extract_strided_slice %42 {offsets = [48, 0], sizes = [16, 32], strides = [1, 1]} : vector<64x32xf32> to vector<16x32xf32>
    %49 = arith.addf %47, %48 : vector<16x32xf32>
    %50 = arith.truncf %49 : vector<16x32xf32> to vector<16x32xbf16>
    %c0_16 = arith.constant 0 : index
    %c0_17 = arith.constant 0 : index
    %51 = vector.load %arg5[%c0_16, %c0_17] : memref<32x32xbf16, #tpu.memory_space<vmem>>, vector<32x32xbf16>
    %cst_18 = arith.constant dense<0.000000e+00> : vector<16x32xf32>
    %52 = tpu.matmul %50, %51, %cst_18 {dimension_numbers = #tpu.dot_dimension_numbers<[1], [0], [0], [1], [0, 0, 1, 1], [], []>} : vector<16x32xbf16>, vector<32x32xbf16>, vector<16x32xf32> -> vector<16x32xf32>
    %53 = arith.addf %0, %52 : vector<16x32xf32>
    %c0_19 = arith.constant 0 : index
    %c0_20 = arith.constant 0 : index
    %54 = vector.load %arg6[%c0_19, %c0_20] : memref<1x32xf32, #tpu.memory_space<vmem>>, vector<1x32xf32>
    %55 = arith.mulf %53, %53 : vector<16x32xf32>
    %cst_21 = arith.constant dense<0.000000e+00> : vector<16xf32>
    %56 = vector.multi_reduction <add>, %55, %cst_21 [1] : vector<16x32xf32> to vector<16xf32>
    %57 = vector.shape_cast %56 : vector<16xf32> to vector<16x1xf32>
    %cst_22 = arith.constant 3.200000e+01 : f32
    %58 = vector.broadcast %cst_22 : f32 to vector<16x1xf32>
    %59 = arith.divf %57, %58 : vector<16x1xf32>
    %cst_23 = arith.constant 9.99999997E-7 : f32
    %60 = vector.broadcast %cst_23 : f32 to vector<16x1xf32>
    %61 = arith.addf %59, %60 : vector<16x1xf32>
    %62 = math.rsqrt %61 : vector<16x1xf32>
    %63 = vector.broadcast %62 : vector<16x1xf32> to vector<16x32xf32>
    %64 = arith.mulf %53, %63 : vector<16x32xf32>
    %65 = vector.broadcast %54 : vector<1x32xf32> to vector<16x32xf32>
    %66 = arith.mulf %64, %65 : vector<16x32xf32>
    %c0_24 = arith.constant 0 : index
    %c0_25 = arith.constant 0 : index
    %67 = vector.load %arg7[%c0_24, %c0_25] : memref<32x16xf32, #tpu.memory_space<vmem>>, vector<32x16xf32>
    %cst_26 = arith.constant dense<0.000000e+00> : vector<16x16xf32>
    %68 = tpu.matmul %66, %67, %cst_26 {dimension_numbers = #tpu.dot_dimension_numbers<[1], [0], [0], [1], [0, 0, 1, 1], [], []>} : vector<16x32xf32>, vector<32x16xf32>, vector<16x16xf32> -> vector<16x16xf32>
    %cst_27 = arith.constant dense<0xFF800000> : vector<16xf32>
    %69 = vector.multi_reduction <maximumf>, %68, %cst_27 [1] : vector<16x16xf32> to vector<16xf32>
    %70 = vector.shape_cast %69 : vector<16xf32> to vector<16x1xf32>
    %71 = vector.broadcast %70 : vector<16x1xf32> to vector<16x16xf32>
    %72 = arith.subf %68, %71 : vector<16x16xf32>
    %73 = math.exp %72 : vector<16x16xf32>
    %cst_28 = arith.constant dense<0.000000e+00> : vector<16xf32>
    %74 = vector.multi_reduction <add>, %73, %cst_28 [1] : vector<16x16xf32> to vector<16xf32>
    %75 = vector.shape_cast %74 : vector<16xf32> to vector<16x1xf32>
    %76 = vector.broadcast %75 : vector<16x1xf32> to vector<16x16xf32>
    %77 = arith.divf %73, %76 : vector<16x16xf32>
    %78 = tpu.iota {dimensions = array<i32: 1>} : vector<16x16xi32>
    %79 = arith.sitofp %78 : vector<16x16xi32> to vector<16x16xf32>
    %cst_29 = arith.constant dense<0xFF800000> : vector<16xf32>
    %80 = vector.multi_reduction <maximumf>, %77, %cst_29 [1] : vector<16x16xf32> to vector<16xf32>
    %81 = vector.shape_cast %80 : vector<16xf32> to vector<16x1xf32>
    %82 = vector.broadcast %81 : vector<16x1xf32> to vector<16x16xf32>
    %83 = arith.cmpf oeq, %77, %82 : vector<16x16xf32>
    %cst_30 = arith.constant 1.600000e+01 : f32
    %84 = vector.broadcast %cst_30 : f32 to vector<16x16xf32>
    %85 = arith.select %83, %79, %84 : vector<16x16xi1>, vector<16x16xf32>
    %cst_31 = arith.constant dense<0x7F800000> : vector<16xf32>
    %86 = vector.multi_reduction <minimumf>, %85, %cst_31 [1] : vector<16x16xf32> to vector<16xf32>
    %87 = vector.shape_cast %86 : vector<16xf32> to vector<16x1xf32>
    %88 = vector.broadcast %87 : vector<16x1xf32> to vector<16x16xf32>
    %89 = arith.cmpf oeq, %79, %88 : vector<16x16xf32>
    %90 = arith.extui %89 : vector<16x16xi1> to vector<16x16xi32>
    %91 = arith.sitofp %90 : vector<16x16xi32> to vector<16x16xf32>
    %cst_32 = arith.constant 1.000000e+00 : f32
    %92 = vector.broadcast %cst_32 : f32 to vector<16x16xf32>
    %93 = arith.subf %92, %91 : vector<16x16xf32>
    %94 = arith.mulf %77, %93 : vector<16x16xf32>
    %cst_33 = arith.constant dense<0xFF800000> : vector<16xf32>
    %95 = vector.multi_reduction <maximumf>, %94, %cst_33 [1] : vector<16x16xf32> to vector<16xf32>
    %96 = vector.shape_cast %95 : vector<16xf32> to vector<16x1xf32>
    %97 = vector.broadcast %96 : vector<16x1xf32> to vector<16x16xf32>
    %98 = arith.cmpf oeq, %94, %97 : vector<16x16xf32>
    %cst_34 = arith.constant 1.600000e+01 : f32
    %99 = vector.broadcast %cst_34 : f32 to vector<16x16xf32>
    %100 = arith.select %98, %79, %99 : vector<16x16xi1>, vector<16x16xf32>
    %cst_35 = arith.constant dense<0x7F800000> : vector<16xf32>
    %101 = vector.multi_reduction <minimumf>, %100, %cst_35 [1] : vector<16x16xf32> to vector<16xf32>
    %102 = vector.shape_cast %101 : vector<16xf32> to vector<16x1xf32>
    %103 = vector.broadcast %102 : vector<16x1xf32> to vector<16x16xf32>
    %104 = arith.cmpf oeq, %79, %103 : vector<16x16xf32>
    %105 = arith.extui %104 : vector<16x16xi1> to vector<16x16xi32>
    %106 = arith.sitofp %105 : vector<16x16xi32> to vector<16x16xf32>
    %107 = arith.addf %81, %96 : vector<16x1xf32>
    %cst_36 = arith.constant 9.99999971E-10 : f32
    %108 = vector.broadcast %cst_36 : f32 to vector<16x1xf32>
    %109 = arith.addf %107, %108 : vector<16x1xf32>
    %110 = arith.divf %81, %109 : vector<16x1xf32>
    %111 = arith.divf %96, %109 : vector<16x1xf32>
    %c0_37 = arith.constant 0 : index
    %c0_38 = arith.constant 0 : index
    %112 = vector.load %arg14[%c0_37, %c0_38] : memref<2x16xf32, #tpu.memory_space<vmem>>, vector<2x16xf32>
    %cst_39 = arith.constant dense<0.000000e+00> : vector<2x16xf32>
    %113 = tpu.matmul %112, %91, %cst_39 {dimension_numbers = #tpu.dot_dimension_numbers<[1], [0], [0], [1], [0, 0, 1, 1], [], []>} : vector<2x16xf32>, vector<16x16xf32>, vector<2x16xf32> -> vector<2x16xf32>
    %cst_40 = arith.constant 1.250000e-01 : f32
    %114 = vector.broadcast %cst_40 : f32 to vector<2x16xf32>
    %115 = arith.mulf %113, %114 : vector<2x16xf32>
    %c0_41 = arith.constant 0 : index
    %c0_42 = arith.constant 0 : index
    %116 = vector.load %arg14[%c0_41, %c0_42] : memref<2x16xf32, #tpu.memory_space<vmem>>, vector<2x16xf32>
    %cst_43 = arith.constant dense<0.000000e+00> : vector<2x16xf32>
    %117 = tpu.matmul %116, %77, %cst_43 {dimension_numbers = #tpu.dot_dimension_numbers<[1], [0], [0], [1], [0, 0, 1, 1], [], []>} : vector<2x16xf32>, vector<16x16xf32>, vector<2x16xf32> -> vector<2x16xf32>
    %cst_44 = arith.constant 1.250000e-01 : f32
    %118 = vector.broadcast %cst_44 : f32 to vector<2x16xf32>
    %119 = arith.mulf %117, %118 : vector<2x16xf32>
    %120 = arith.mulf %115, %119 : vector<2x16xf32>
    %cst_45 = arith.constant dense<0.000000e+00> : vector<2xf32>
    %121 = vector.multi_reduction <add>, %120, %cst_45 [1] : vector<2x16xf32> to vector<2xf32>
    %122 = vector.shape_cast %121 : vector<2xf32> to vector<2x1xf32>
    %cst_46 = arith.constant dense<0.000000e+00> : vector<1xf32>
    %123 = vector.multi_reduction <add>, %122, %cst_46 [0] : vector<2x1xf32> to vector<1xf32>
    %124 = vector.shape_cast %123 : vector<1xf32> to vector<1x1xf32>
    %cst_47 = arith.constant 8.000000e+00 : f32
    %125 = vector.broadcast %cst_47 : f32 to vector<1x1xf32>
    %126 = arith.mulf %124, %125 : vector<1x1xf32>
    %c0_48 = arith.constant 0 : index
    %c0_49 = arith.constant 0 : index
    %127 = vector.load %arg17[%c0_48, %c0_49] : memref<1x1xf32, #tpu.memory_space<vmem>>, vector<1x1xf32>
    tpu.vector_store %arg17[%c0_48, %c0_49], %126 {strides = array<i32>} : memref<1x1xf32, #tpu.memory_space<vmem>>, vector<1x1xf32>,
    %c0_50 = arith.constant 0 : index
    %c0_51 = arith.constant 0 : index
    %128 = vector.load %arg2[%c0_50, %c0_51] : memref<16x1xf32, #tpu.memory_space<vmem>>, vector<16x1xf32>
    %cst_52 = arith.constant 5.000000e+00 : f32
    %129 = vector.broadcast %cst_52 : f32 to vector<16x1xf32>
    %130 = arith.mulf %111, %129 : vector<16x1xf32>
    %131 = arith.cmpf olt, %128, %130 : vector<16x1xf32>
    %132 = arith.extui %131 : vector<16x1xi1> to vector<16x1xi32>
    %133 = arith.sitofp %132 : vector<16x1xi32> to vector<16x1xf32>
    %134 = vector.broadcast %133 : vector<16x1xf32> to vector<16x16xf32>
    %135 = arith.mulf %106, %134 : vector<16x16xf32>
    %c0_53 = arith.constant 0 : index
    %c0_54 = arith.constant 0 : index
    %136 = vector.load %arg12[%c0_53, %c0_54] : memref<16x16xf32, #tpu.memory_space<vmem>>, vector<16x16xf32>
    %c0_55 = arith.constant 0 : index
    %c0_56 = arith.constant 0 : index
    %137 = vector.load %arg13[%c0_55, %c0_56] : memref<16x16xf32, #tpu.memory_space<vmem>>, vector<16x16xf32>
    %cst_57 = arith.constant dense<0.000000e+00> : vector<16x16xf32>
    %138 = tpu.matmul %136, %91, %cst_57 {dimension_numbers = #tpu.dot_dimension_numbers<[1], [0], [0], [1], [0, 0, 1, 1], [], []>} : vector<16x16xf32>, vector<16x16xf32>, vector<16x16xf32> -> vector<16x16xf32>
    %139 = arith.mulf %138, %91 : vector<16x16xf32>
    %cst_58 = arith.constant 4.000000e+00 : f32
    %140 = vector.broadcast %cst_58 : f32 to vector<16x16xf32>
    %141 = arith.cmpf olt, %139, %140 : vector<16x16xf32>
    %142 = arith.extui %141 : vector<16x16xi1> to vector<16x16xi32>
    %143 = arith.sitofp %142 : vector<16x16xi32> to vector<16x16xf32>
    %144 = arith.mulf %91, %143 : vector<16x16xf32>
    %cst_59 = arith.constant dense<0.000000e+00> : vector<16x16xf32>
    %145 = tpu.matmul %137, %144, %cst_59 {dimension_numbers = #tpu.dot_dimension_numbers<[1], [0], [0], [1], [0, 0, 1, 1], [], []>} : vector<16x16xf32>, vector<16x16xf32>, vector<16x16xf32> -> vector<16x16xf32>
    %cst_60 = arith.constant dense<0.000000e+00> : vector<16x16xf32>
    %146 = tpu.matmul %136, %135, %cst_60 {dimension_numbers = #tpu.dot_dimension_numbers<[1], [0], [0], [1], [0, 0, 1, 1], [], []>} : vector<16x16xf32>, vector<16x16xf32>, vector<16x16xf32> -> vector<16x16xf32>
    %147 = arith.addf %146, %145 : vector<16x16xf32>
    %148 = arith.mulf %147, %135 : vector<16x16xf32>
    %cst_61 = arith.constant 4.000000e+00 : f32
    %149 = vector.broadcast %cst_61 : f32 to vector<16x16xf32>
    %150 = arith.cmpf olt, %148, %149 : vector<16x16xf32>
    %151 = arith.extui %150 : vector<16x16xi1> to vector<16x16xi32>
    %152 = arith.sitofp %151 : vector<16x16xi32> to vector<16x16xf32>
    %153 = arith.mulf %135, %152 : vector<16x16xf32>
    %154 = vector.broadcast %110 : vector<16x1xf32> to vector<16x16xf32>
    %155 = arith.mulf %154, %144 : vector<16x16xf32>
    %156 = vector.broadcast %111 : vector<16x1xf32> to vector<16x16xf32>
    %157 = arith.mulf %156, %153 : vector<16x16xf32>
    %158 = arith.addf %155, %157 : vector<16x16xf32>
    %c0_62 = arith.constant 0 : index
    %c0_63 = arith.constant 0 : index
    %159 = vector.load %arg15[%c0_62, %c0_63] : memref<16x1024xf32, #tpu.memory_space<vmem>>, vector<16x1024xf32>
    %cst_64 = arith.constant dense<0.000000e+00> : vector<16x1024xf32>
    %160 = tpu.matmul %158, %159, %cst_64 {dimension_numbers = #tpu.dot_dimension_numbers<[1], [0], [0], [1], [0, 0, 1, 1], [], []>} : vector<16x16xf32>, vector<16x1024xf32>, vector<16x1024xf32> -> vector<16x1024xf32>
    %161 = arith.truncf %66 : vector<16x32xf32> to vector<16x32xbf16>
    %c0_65 = arith.constant 0 : index
    %c0_66 = arith.constant 0 : index
    %162 = vector.load %arg8[%c0_65, %c0_66] : memref<32x1024xbf16, #tpu.memory_space<vmem>>, vector<32x1024xbf16>
    %cst_67 = arith.constant dense<0.000000e+00> : vector<16x1024xf32>
    %163 = tpu.matmul %161, %162, %cst_67 {dimension_numbers = #tpu.dot_dimension_numbers<[1], [0], [0], [1], [0, 0, 1, 1], [], []>} : vector<16x32xbf16>, vector<32x1024xbf16>, vector<16x1024xf32> -> vector<16x1024xf32>
    %cst_68 = arith.constant 0.000000e+00 : f32
    %164 = vector.broadcast %cst_68 : f32 to vector<16x1024xf32>
    %165 = arith.maximumf %163, %164 : vector<16x1024xf32>
    %166 = arith.mulf %165, %160 : vector<16x1024xf32>
    %167 = arith.truncf %166 : vector<16x1024xf32> to vector<16x1024xbf16>
    %c0_69 = arith.constant 0 : index
    %c0_70 = arith.constant 0 : index
    %168 = vector.load %arg9[%c0_69, %c0_70] : memref<1024x32xbf16, #tpu.memory_space<vmem>>, vector<1024x32xbf16>
    %cst_71 = arith.constant dense<0.000000e+00> : vector<16x32xf32>
    %169 = tpu.matmul %167, %168, %cst_71 {dimension_numbers = #tpu.dot_dimension_numbers<[1], [0], [0], [1], [0, 0, 1, 1], [], []>} : vector<16x1024xbf16>, vector<1024x32xbf16>, vector<16x32xf32> -> vector<16x32xf32>
    %170 = arith.addf %53, %169 : vector<16x32xf32>
    %c0_72 = arith.constant 0 : index
    %c0_73 = arith.constant 0 : index
    %171 = vector.load %arg16[%c0_72, %c0_73] : memref<16x32xf32, #tpu.memory_space<vmem>>, vector<16x32xf32>
    tpu.vector_store %arg16[%c0_72, %c0_73], %170 {strides = array<i32>} : memref<16x32xf32, #tpu.memory_space<vmem>>, vector<16x32xf32>,
    return
  }
  func.func @transform_0(%arg0: i32) -> (i32, i32) {
    %c0_i32 = arith.constant 0 : i32
    %c0_i32_0 = arith.constant 0 : i32
    %c0_i32_1 = arith.constant 0 : i32
    return %c0_i32, %c0_i32_0 : i32, i32
  }
  func.func @transform_1(%arg0: i32) -> (i32, i32) {
    %c0_i32 = arith.constant 0 : i32
    %c0_i32_0 = arith.constant 0 : i32
    %c0_i32_1 = arith.constant 0 : i32
    return %c0_i32, %c0_i32_0 : i32, i32
  }
  func.func @transform_2(%arg0: i32) -> (i32, i32) {
    %c0_i32 = arith.constant 0 : i32
    %c0_i32_0 = arith.constant 0 : i32
    %c0_i32_1 = arith.constant 0 : i32
    return %c0_i32, %c0_i32_0 : i32, i32
  }
  func.func @transform_3(%arg0: i32) -> (i32, i32) {
    %c0_i32 = arith.constant 0 : i32
    %c0_i32_0 = arith.constant 0 : i32
    %c0_i32_1 = arith.constant 0 : i32
    return %c0_i32, %c0_i32_0 : i32, i32
  }
  func.func @transform_4(%arg0: i32) -> (i32, i32) {
    %c0_i32 = arith.constant 0 : i32
    %c0_i32_0 = arith.constant 0 : i32
    %c0_i32_1 = arith.constant 0 : i32
    return %c0_i32, %c0_i32_0 : i32, i32
  }
  func.func @transform_5(%arg0: i32) -> (i32, i32) {
    %c0_i32 = arith.constant 0 : i32
    %c0_i32_0 = arith.constant 0 : i32
    %c0_i32_1 = arith.constant 0 : i32
    return %c0_i32, %c0_i32_0 : i32, i32
  }
  func.func @transform_6(%arg0: i32) -> (i32, i32) {
    %c0_i32 = arith.constant 0 : i32
    %c0_i32_0 = arith.constant 0 : i32
    %c0_i32_1 = arith.constant 0 : i32
    return %c0_i32, %c0_i32_0 : i32, i32
  }
  func.func @transform_7(%arg0: i32) -> (i32, i32) {
    %c0_i32 = arith.constant 0 : i32
    %c0_i32_0 = arith.constant 0 : i32
    %c0_i32_1 = arith.constant 0 : i32
    return %c0_i32, %c0_i32_0 : i32, i32
  }
  func.func @transform_8(%arg0: i32) -> (i32, i32) {
    %c0_i32 = arith.constant 0 : i32
    %c0_i32_0 = arith.constant 0 : i32
    %c0_i32_1 = arith.constant 0 : i32
    return %c0_i32, %c0_i32_0 : i32, i32
  }
  func.func @transform_9(%arg0: i32) -> (i32, i32) {
    %c0_i32 = arith.constant 0 : i32
    %c0_i32_0 = arith.constant 0 : i32
    %c0_i32_1 = arith.constant 0 : i32
    return %c0_i32, %c0_i32_0 : i32, i32
  }
  func.func @transform_10(%arg0: i32) -> (i32, i32) {
    %c0_i32 = arith.constant 0 : i32
    %c0_i32_0 = arith.constant 0 : i32
    %c0_i32_1 = arith.constant 0 : i32
    return %c0_i32, %c0_i32_0 : i32, i32
  }
  func.func @transform_11(%arg0: i32) -> (i32, i32) {
    %c0_i32 = arith.constant 0 : i32
    %c0_i32_0 = arith.constant 0 : i32
    %c0_i32_1 = arith.constant 0 : i32
    return %c0_i32, %c0_i32_0 : i32, i32
  }
  func.func @transform_12(%arg0: i32) -> (i32, i32) {
    %c0_i32 = arith.constant 0 : i32
    %c0_i32_0 = arith.constant 0 : i32
    %c0_i32_1 = arith.constant 0 : i32
    return %c0_i32, %c0_i32_0 : i32, i32
  }
  func.func @transform_13(%arg0: i32) -> (i32, i32) {
    %c0_i32 = arith.constant 0 : i32
    %c0_i32_0 = arith.constant 0 : i32
    %c0_i32_1 = arith.constant 0 : i32
    return %c0_i32, %c0_i32_0 : i32, i32
  }
  func.func @transform_14(%arg0: i32) -> (i32, i32) {
    %c0_i32 = arith.constant 0 : i32
    %c0_i32_0 = arith.constant 0 : i32
    %c0_i32_1 = arith.constant 0 : i32
    return %c0_i32, %c0_i32_0 : i32, i32
  }
  func.func @transform_15(%arg0: i32) -> (i32, i32) {
    %c0_i32 = arith.constant 0 : i32
    %c0_i32_0 = arith.constant 0 : i32
    %c0_i32_1 = arith.constant 0 : i32
    return %c0_i32, %c0_i32_0 : i32, i32
  }
  func.func @transform_16(%arg0: i32) -> (i32, i32) {
    %c0_i32 = arith.constant 0 : i32
    %c0_i32_0 = arith.constant 0 : i32
    %c0_i32_1 = arith.constant 0 : i32
    return %c0_i32, %c0_i32_0 : i32, i32
  }
}

</mosaic_0001>

<llo_original>
// kernel: tpu_custom_call.1
$region0: #{tpu_custom_call.1}
  #allocation0 [shape = 'u32[]', space=smem, size = 0x4, offset = 0x4, fixed_abs, tag = 'smem constant byte address 0x4 - core index']
  #allocation1 [shape = 'u32[144,128]{1,0:T(1,128)}', space=vmem, size = 0x12000, scoped, tag = 'internal scratch']
  %s0 = inlined_call_operand.vmem [shape: f32[16,32], index: 0, kind: input, shape index: {}]
  %s1 = inlined_call_operand.vmem [shape: f32[16,1], index: 1, kind: input, shape index: {}]
  %s2 = inlined_call_operand.vmem [shape: f32[1,32], index: 2, kind: input, shape index: {}]
  %s3 = inlined_call_operand.vmem [shape: bf16[32,96], index: 3, kind: input, shape index: {}]
  %s4 = inlined_call_operand.vmem [shape: bf16[32,32], index: 4, kind: input, shape index: {}]
  %s5 = inlined_call_operand.vmem [shape: f32[1,32], index: 5, kind: input, shape index: {}]
  %s6 = inlined_call_operand.vmem [shape: f32[32,16], index: 6, kind: input, shape index: {}]
  %s7 = inlined_call_operand.vmem [shape: bf16[32,1024], index: 7, kind: input, shape index: {}]
  %s8 = inlined_call_operand.vmem [shape: bf16[1024,32], index: 8, kind: input, shape index: {}]
  %s9 = inlined_call_operand.vmem [shape: f32[64,64], index: 9, kind: input, shape index: {}]
  %s10 = inlined_call_operand.vmem [shape: f32[64,32], index: 10, kind: input, shape index: {}]
  %s11 = inlined_call_operand.vmem [shape: f32[16,16], index: 11, kind: input, shape index: {}]
  %s12 = inlined_call_operand.vmem [shape: f32[16,16], index: 12, kind: input, shape index: {}]
  %s13 = inlined_call_operand.vmem [shape: f32[2,16], index: 13, kind: input, shape index: {}]
  %s14 = inlined_call_operand.vmem [shape: f32[16,1024], index: 14, kind: input, shape index: {}]
  %s15 = inlined_call_operand.hbm [shape: f32[16,32], index: 15, kind: output, shape index: {0}]
  %s16 = inlined_call_operand.hbm [shape: f32[1,1], index: 16, kind: output, shape index: {1}]
  %17 = xla_tuple %s15, %s16
  %s18 = sld [smem:[#allocation0]]
  $region78: #{tpu_custom_call.1} parent=0
    _
  %s20 = ssub.s32 1, %s18
  %s21 = scalar_select 0, %s20, %s18
  $region1: #{tpu_custom_call.1} parent=0
    #allocation2 [shape = 'u8[8192]{0}', space=vmem, size = 0x2000, scoped, tag = 'output window, operand 0, single buffered']
    #allocation3 [shape = 's32[1]{0}', space=sflag, size = 0x4, scoped, tag = 'scoped memory for tpu_custom_call.1']
    #allocation4 [shape = 'u8[512]{0}', space=vmem, size = 0x400, scoped, tag = 'output window, operand 1, single buffered']
    #allocation5 [shape = 's32[1]{0}', space=sflag, size = 0x4, scoped, tag = 'scoped memory for tpu_custom_call.1']
    %22 = vsyncpa [#allocation3], 0
    %23 = vsyncpa [#allocation5], 0
    // Predicated region
    $region2: #{tpu_custom_call.1} parent=1 // pred_check
      _
    $region3: #{tpu_custom_call.1} parent=1 // pred_check_branch
      %25 = sbr.rel (0) target = $region5
    $region4: #{tpu_custom_call.1} parent=1 // pred_region
      _
    $region5: #{tpu_custom_call.1} parent=1 // pred_fallthru
      _
    // Predicated region
    $region6: #{tpu_custom_call.1} parent=1 // pred_check
      _
    $region7: #{tpu_custom_call.1} parent=1 // pred_check_branch
      %27 = sbr.rel (0) target = $region9
    $region8: #{tpu_custom_call.1} parent=1 // pred_region
      _
    $region9: #{tpu_custom_call.1} parent=1 // pred_fallthru
      _
    // Predicated region
    $region10: #{tpu_custom_call.1} parent=1 // pred_check
      _
    $region11: #{tpu_custom_call.1} parent=1 // pred_check_branch
      %29 = sbr.rel (0) target = $region13
    $region12: #{tpu_custom_call.1} parent=1 // pred_region
      _
    $region13: #{tpu_custom_call.1} parent=1 // pred_fallthru
      _
    // Predicated region
    $region14: #{tpu_custom_call.1} parent=1 // pred_check
      _
    $region15: #{tpu_custom_call.1} parent=1 // pred_check_branch
      %31 = sbr.rel (0) target = $region17
    $region16: #{tpu_custom_call.1} parent=1 // pred_region
      _
    $region17: #{tpu_custom_call.1} parent=1 // pred_fallthru
      _
    // Predicated region
    $region18: #{tpu_custom_call.1} parent=1 // pred_check
      _
    $region19: #{tpu_custom_call.1} parent=1 // pred_check_branch
      %33 = sbr.rel (0) target = $region21
    $region20: #{tpu_custom_call.1} parent=1 // pred_region
      _
    $region21: #{tpu_custom_call.1} parent=1 // pred_fallthru
      _
    // Predicated region
    $region22: #{tpu_custom_call.1} parent=1 // pred_check
      _
    $region23: #{tpu_custom_call.1} parent=1 // pred_check_branch
      %35 = sbr.rel (0) target = $region25
    $region24: #{tpu_custom_call.1} parent=1 // pred_region
      _
    $region25: #{tpu_custom_call.1} parent=1 // pred_fallthru
      _
    // Predicated region
    $region26: #{tpu_custom_call.1} parent=1 // pred_check
      _
    $region27: #{tpu_custom_call.1} parent=1 // pred_check_branch
      %37 = sbr.rel (0) target = $region29
    $region28: #{tpu_custom_call.1} parent=1 // pred_region
      _
    $region29: #{tpu_custom_call.1} parent=1 // pred_fallthru
      _
    // Predicated region
    $region30: #{tpu_custom_call.1} parent=1 // pred_check
      _
    $region31: #{tpu_custom_call.1} parent=1 // pred_check_branch
      %39 = sbr.rel (0) target = $region33
    $region32: #{tpu_custom_call.1} parent=1 // pred_region
      _
    $region33: #{tpu_custom_call.1} parent=1 // pred_fallthru
      _
    // Predicated region
    $region34: #{tpu_custom_call.1} parent=1 // pred_check
      _
    $region35: #{tpu_custom_call.1} parent=1 // pred_check_branch
      %41 = sbr.rel (0) target = $region37
    $region36: #{tpu_custom_call.1} parent=1 // pred_region
      _
    $region37: #{tpu_custom_call.1} parent=1 // pred_fallthru
      _
    // Predicated region
    $region38: #{tpu_custom_call.1} parent=1 // pred_check
      _
    $region39: #{tpu_custom_call.1} parent=1 // pred_check_branch
      %43 = sbr.rel (0) target = $region41
    $region40: #{tpu_custom_call.1} parent=1 // pred_region
      _
    $region41: #{tpu_custom_call.1} parent=1 // pred_fallthru
      _
    // Predicated region
    $region42: #{tpu_custom_call.1} parent=1 // pred_check
      _
    $region43: #{tpu_custom_call.1} parent=1 // pred_check_branch
      %45 = sbr.rel (0) target = $region45
    $region44: #{tpu_custom_call.1} parent=1 // pred_region
      _
    $region45: #{tpu_custom_call.1} parent=1 // pred_fallthru
      _
    // Predicated region
    $region46: #{tpu_custom_call.1} parent=1 // pred_check
      _
    $region47: #{tpu_custom_call.1} parent=1 // pred_check_branch
      %47 = sbr.rel (0) target = $region49
    $region48: #{tpu_custom_call.1} parent=1 // pred_region
      _
    $region49: #{tpu_custom_call.1} parent=1 // pred_fallthru
      _
    // Predicated region
    $region50: #{tpu_custom_call.1} parent=1 // pred_check
      _
    $region51: #{tpu_custom_call.1} parent=1 // pred_check_branch
      %49 = sbr.rel (0) target = $region53
    $region52: #{tpu_custom_call.1} parent=1 // pred_region
      _
    $region53: #{tpu_custom_call.1} parent=1 // pred_fallthru
      _
    // Predicated region
    $region54: #{tpu_custom_call.1} parent=1 // pred_check
      _
    $region55: #{tpu_custom_call.1} parent=1 // pred_check_branch
      %51 = sbr.rel (0) target = $region57
    $region56: #{tpu_custom_call.1} parent=1 // pred_region
      _
    $region57: #{tpu_custom_call.1} parent=1 // pred_fallthru
      _
    // Predicated region
    $region58: #{tpu_custom_call.1} parent=1 // pred_check
      _
    $region59: #{tpu_custom_call.1} parent=1 // pred_check_branch
      %53 = sbr.rel (0) target = $region61
    $region60: #{tpu_custom_call.1} parent=1 // pred_region
      _
    $region61: #{tpu_custom_call.1} parent=1 // pred_fallthru
      _
    %v55 = vld [vmem:[%s0] sm:$0xff]
    %v56 = vld [vmem:[%s0 + $0x8] sm:$0xff]
    %v57 = vld [vmem:[%s2] sm:$0x1]
    %v58 = vmul.f32 %v55, %v55
    %v59 = vmul.f32 %v56, %v56
    %vm60 = vcmask 261120
    %v61 = vsel %vm60, %v58, 0.0
    %62 = vadd.xlane.f32.xlu0 %v61
    %v63 = vpop.xlane.xlu0 %62
    %v64 = vsel %vm60, %v59, 0.0
    %65 = vadd.xlane.f32.xlu0 %v64
    %v66 = vpop.xlane.xlu0 %65
    %v67 = vrcp.pop 32.0
    %v68 = vmul.f32 %v63, %v67
    %v69 = vmul.f32 %v66, %v67
    %v70 = vadd.f32 %v68, 1e-06
    %v71 = vadd.f32 %v69, 1e-06
    %v72 = vrsqrt.pop %v70
    %v73 = vrsqrt.pop %v71
    %v74 = vmul.f32 %v55, %v72
    %v75 = vmul.f32 %v56, %v73
    %v77 = vlaneseq
    %v78 = vshrl.u32 %v77, 7
    %v79 = vsub.s32 0, %v78
    %v80 = vrot.slane %v57, %v79
    %v82 = vmul.f32 %v74, %v80
    %v83 = vmul.f32 %v75, %v80
    %v84 = vpack.c.bf16 %v83, %v82
    %v85 = vld [vmem:[%s3] sm:$0xf]
    %v86 = vld [vmem:[%s3 + $0x4] sm:$0xf]
    %v87 = vld [vmem:[%s3 + $0x8] sm:$0xf]
    %v88 = vld [vmem:[%s3 + $0xc] sm:$0xf]
    %v93 = vunpack.c.l.b16 %v85
    %v94 = vunpack.c.l.b16 %v86
    %v95 = vunpack.c.l.b16 %v87
    %v96 = vunpack.c.l.b16 %v88
    %v97 = vpack.c.b16 %v94, %v93
    %v98 = vpack.c.b16 %v96, %v95
    %v102 = vsel %vm60, %v84, 0
    %104 = vmatprep.subr.bf16.mxu0 0
    %105 = vmatpush1.bf16.msra.mxu0 %v97
    %106 = vmatprep.subr.bf16.mxu0 0
    %107 = vmatpush1.bf16.msra.mxu0 %v98
    %108 = vmatprep.subr.bf16.mxu0 0
    %109 = vmatpush1.bf16.msra.mxu0 0
    %110 = vmatprep.subr.bf16.mxu0 0
    %111 = vmatpush1.bf16.msra.mxu0 0
    %112 = vmatprep.subr.bf16.mxu0 0
    %113 = vmatpush1.bf16.msra.mxu0 0
    %114 = vmatprep.subr.bf16.mxu0 0
    %115 = vmatpush1.bf16.msra.mxu0 0
    %116 = vmatprep.subr.bf16.mxu0 0
    %117 = vmatpush1.bf16.msra.mxu0 0
    %118 = vmatprep.subr.bf16.mxu0 0
    %119 = vmatpush1.bf16.msra.mxu0 0
    %120 = vmatprep.subr.bf16.mxu0 0
    %121 = vmatpush1.bf16.msra.mxu0 0
    %122 = vmatprep.subr.bf16.mxu0 0
    %123 = vmatpush1.bf16.msra.mxu0 0
    %124 = vmatprep.subr.bf16.mxu0 0
    %125 = vmatpush1.bf16.msra.mxu0 0
    %126 = vmatprep.subr.bf16.mxu0 0
    %127 = vmatpush1.bf16.msra.mxu0 0
    %128 = vmatprep.subr.bf16.mxu0 0
    %129 = vmatpush1.bf16.msra.mxu0 0
    %130 = vmatprep.subr.bf16.mxu0 0
    %131 = vmatpush1.bf16.msra.mxu0 0
    %132 = vmatprep.subr.bf16.mxu0 0
    %133 = vmatpush1.bf16.msra.mxu0 0
    %134 = vmatprep.subr.bf16.mxu0 0
    %135 = vmatpush1.bf16.msra.mxu0 0
    %136 = vmatprep.mubr.bf16.mxu0 0
    %137 = vmatmul.mubr.bf16.gmra.mrb[0].mxu0 %v102
    %v138 = vpop.f32.mrb[0].mxu0
    %v139 = vadd.f32 0.0, %v138
    %v140 = vpop.f32.mrb[0].mxu0
    %v141 = vpop.f32.mrb[0].mxu0
    %v142 = vadd.f32 0.0, %v141
    %v143 = vpop.f32.mrb[0].mxu0
    %144 = vdwg.mxu0
    %v145 = vld [vmem:[%s10] sm:$0xff]
    %v146 = vld [vmem:[%s10 + $0x8] sm:$0xff]
    %v147 = vld [vmem:[%s10 + $0x10] sm:$0xff]
    %v148 = vld [vmem:[%s10 + $0x18] sm:$0xff]
    %v149 = vld [vmem:[%s10 + $0x20] sm:$0xff]
    %v150 = vld [vmem:[%s10 + $0x28] sm:$0xff]
    %v151 = vld [vmem:[%s10 + $0x30] sm:$0xff]
    %v152 = vld [vmem:[%s10 + $0x38] sm:$0xff]
    %161 = vrot.lane.b32.xlu0 %v145, 32
    %v162 = vpop.permute.xlu0 %161
    %163 = vrot.lane.b32.xlu0 %v146, 32
    %v164 = vpop.permute.xlu0 %163
    %165 = vrot.lane.b32.xlu0 %v147, 32
    %v166 = vpop.permute.xlu0 %165
    %167 = vrot.lane.b32.xlu0 %v148, 32
    %v168 = vpop.permute.xlu0 %167
    %169 = vrot.lane.b32.xlu0 %v149, 32
    %v170 = vpop.permute.xlu0 %169
    %171 = vrot.lane.b32.xlu0 %v150, 32
    %v172 = vpop.permute.xlu0 %171
    %173 = vrot.lane.b32.xlu0 %v151, 32
    %v174 = vpop.permute.xlu0 %173
    %175 = vrot.lane.b32.xlu0 %v152, 32
    %v176 = vpop.permute.xlu0 %175
    %v185 = vmul.f32 %v139, %v162
    %v186 = vmul.f32 %v142, %v164
    %v187 = vmul.f32 %v139, %v166
    %v188 = vmul.f32 %v142, %v168
    %v189 = vmul.f32 %v139, %v170
    %v190 = vmul.f32 %v142, %v172
    %v191 = vmul.f32 %v139, %v174
    %v192 = vmul.f32 %v142, %v176
    %193 = vrot.lane.b32.xlu0 %v145, 64
    %v194 = vpop.permute.xlu0 %193
    %195 = vrot.lane.b32.xlu0 %v146, 64
    %v196 = vpop.permute.xlu0 %195
    %197 = vrot.lane.b32.xlu0 %v147, 64
    %v198 = vpop.permute.xlu0 %197
    %199 = vrot.lane.b32.xlu0 %v148, 64
    %v200 = vpop.permute.xlu0 %199
    %201 = vrot.lane.b32.xlu0 %v149, 64
    %v202 = vpop.permute.xlu0 %201
    %203 = vrot.lane.b32.xlu0 %v150, 64
    %v204 = vpop.permute.xlu0 %203
    %205 = vrot.lane.b32.xlu0 %v151, 64
    %v206 = vpop.permute.xlu0 %205
    %207 = vrot.lane.b32.xlu0 %v152, 64
    %v208 = vpop.permute.xlu0 %207
    %v217 = vmul.f32 %v139, %v194
    %v218 = vmul.f32 %v142, %v196
    %v219 = vmul.f32 %v139, %v198
    %v220 = vmul.f32 %v142, %v200
    %v221 = vmul.f32 %v139, %v202
    %v222 = vmul.f32 %v142, %v204
    %v223 = vmul.f32 %v139, %v206
    %v224 = vmul.f32 %v142, %v208
    %v225 = vpack.c.bf16 %v142, %v139
    %v226 = vpack.c.bf16 %v186, %v185
    %v227 = vpack.c.bf16 %v188, %v187
    %v228 = vpack.c.bf16 %v190, %v189
    %v229 = vpack.c.bf16 %v192, %v191
    %234 = vrot.lane.b32.xlu0 %v226, 96
    %v235 = vpop.permute.xlu0 %234
    %236 = vrot.lane.b32.xlu0 %v227, 96
    %v237 = vpop.permute.xlu0 %236
    %238 = vrot.lane.b32.xlu0 %v228, 96
    %v239 = vpop.permute.xlu0 %238
    %240 = vrot.lane.b32.xlu0 %v229, 96
    %v241 = vpop.permute.xlu0 %240
    %v243 = vsel %vm60, %v225, 0
    %v246 = vsel %vm60, %v235, 0
    %v249 = vsel %vm60, %v237, 0
    %v252 = vsel %vm60, %v239, 0
    %v255 = vsel %vm60, %v241, 0
    %257 = vmatprep.subr.bf16.mxu0 0
    %258 = vmatpush1.bf16.xpose.msra.mxu0 %v246
    %259 = vmatprep.subr.bf16.mxu0 0
    %260 = vmatpush1.bf16.xpose.msra.mxu0 %v249
    %261 = vmatprep.subr.bf16.mxu0 0
    %262 = vmatpush1.bf16.xpose.msra.mxu0 %v252
    %263 = vmatprep.subr.bf16.mxu0 0
    %264 = vmatpush1.bf16.xpose.msra.mxu0 %v255
    %265 = vmatprep.subr.bf16.mxu0 0
    %266 = vmatpush1.bf16.xpose.msra.mxu0 0
    %267 = vmatprep.subr.bf16.mxu0 0
    %268 = vmatpush1.bf16.xpose.msra.mxu0 0
    %269 = vmatprep.subr.bf16.mxu0 0
    %270 = vmatpush1.bf16.xpose.msra.mxu0 0
    %271 = vmatprep.subr.bf16.mxu0 0
    %272 = vmatpush1.bf16.xpose.msra.mxu0 0
    %273 = vmatprep.subr.bf16.mxu0 0
    %274 = vmatpush1.bf16.xpose.msra.mxu0 0
    %275 = vmatprep.subr.bf16.mxu0 0
    %276 = vmatpush1.bf16.xpose.msra.mxu0 0
    %277 = vmatprep.subr.bf16.mxu0 0
    %278 = vmatpush1.bf16.xpose.msra.mxu0 0
    %279 = vmatprep.subr.bf16.mxu0 0
    %280 = vmatpush1.bf16.xpose.msra.mxu0 0
    %281 = vmatprep.subr.bf16.mxu0 0
    %282 = vmatpush1.bf16.xpose.msra.mxu0 0
    %283 = vmatprep.subr.bf16.mxu0 0
    %284 = vmatpush1.bf16.xpose.msra.mxu0 0
    %285 = vmatprep.subr.bf16.mxu0 0
    %286 = vmatpush1.bf16.xpose.msra.mxu0 0
    %287 = vmatprep.subr.bf16.mxu0 0
    %288 = vmatpush1.bf16.xpose.msra.mxu0 0
    %289 = vmatprep.mubr.bf16.mxu0 0
    %290 = vmatmul.mubr.bf16.gmra.mrb[0].mxu0 %v243
    %v291 = vpop.f32.mrb[0].mxu0
    %v292 = vadd.f32 0.0, %v291
    %v293 = vpop.f32.mrb[0].mxu0
    %v294 = vpop.f32.mrb[0].mxu0
    %v295 = vadd.f32 0.0, %v294
    %v296 = vpop.f32.mrb[0].mxu0
    %297 = vdwg.mxu0
    %v298 = vld [vmem:[%s9] sm:$0xff]
    %v299 = vld [vmem:[%s9 + $0x8] sm:$0xff]
    %v300 = vld [vmem:[%s9 + $0x10] sm:$0xff]
    %v301 = vld [vmem:[%s9 + $0x18] sm:$0xff]
    %v302 = vld [vmem:[%s9 + $0x20] sm:$0xff]
    %v303 = vld [vmem:[%s9 + $0x28] sm:$0xff]
    %v304 = vld [vmem:[%s9 + $0x30] sm:$0xff]
    %v305 = vld [vmem:[%s9 + $0x38] sm:$0xff]
    %v306 = vadd.f32 %v292, %v298
    %v307 = vadd.f32 %v295, %v299
    %v308 = vadd.f32 %v292, %v300
    %v309 = vadd.f32 %v295, %v301
    %v310 = vadd.f32 %v292, %v302
    %v311 = vadd.f32 %v295, %v303
    %v312 = vadd.f32 %v292, %v304
    %v313 = vadd.f32 %v295, %v305
    %vm314 = vcmask 523264
    %v315 = vsel %vm314, %v306, -inf
    %316 = vmax.xlane.f32.xlu0 %v315
    %v317 = vpop.xlane.xlu0 %316
    %v318 = vsel %vm314, %v307, -inf
    %319 = vmax.xlane.f32.xlu0 %v318
    %v320 = vpop.xlane.xlu0 %319
    %v321 = vsel %vm314, %v308, -inf
    %322 = vmax.xlane.f32.xlu0 %v321
    %v323 = vpop.xlane.xlu0 %322
    %v324 = vsel %vm314, %v309, -inf
    %325 = vmax.xlane.f32.xlu0 %v324
    %v326 = vpop.xlane.xlu0 %325
    %v327 = vsel %vm314, %v310, -inf
    %328 = vmax.xlane.f32.xlu0 %v327
    %v329 = vpop.xlane.xlu0 %328
    %v330 = vsel %vm314, %v311, -inf
    %331 = vmax.xlane.f32.xlu0 %v330
    %v332 = vpop.xlane.xlu0 %331
    %v333 = vsel %vm314, %v312, -inf
    %334 = vmax.xlane.f32.xlu0 %v333
    %v335 = vpop.xlane.xlu0 %334
    %v336 = vsel %vm314, %v313, -inf
    %337 = vmax.xlane.f32.xlu0 %v336
    %v338 = vpop.xlane.xlu0 %337
    %v339 = vsub.f32 %v306, %v317
    %v340 = vsub.f32 %v307, %v320
    %v341 = vsub.f32 %v308, %v323
    %v342 = vsub.f32 %v309, %v326
    %v343 = vsub.f32 %v310, %v329
    %v344 = vsub.f32 %v311, %v332
    %v345 = vsub.f32 %v312, %v335
    %v346 = vsub.f32 %v313, %v338
    %v347 = vmul.f32 %v339, 1.442695
    %v348 = vpow.pop %v347
    %v349 = vmul.f32 %v340, 1.442695
    %v350 = vpow.pop %v349
    %v351 = vmul.f32 %v341, 1.442695
    %v352 = vpow.pop %v351
    %v353 = vmul.f32 %v342, 1.442695
    %v354 = vpow.pop %v353
    %v355 = vmul.f32 %v343, 1.442695
    %v356 = vpow.pop %v355
    %v357 = vmul.f32 %v344, 1.442695
    %v358 = vpow.pop %v357
    %v359 = vmul.f32 %v345, 1.442695
    %v360 = vpow.pop %v359
    %v361 = vmul.f32 %v346, 1.442695
    %v362 = vpow.pop %v361
    %v363 = vsel %vm314, %v348, 0.0
    %364 = vadd.xlane.f32.xlu0 %v363
    %v365 = vpop.xlane.xlu0 %364
    %v366 = vsel %vm314, %v350, 0.0
    %367 = vadd.xlane.f32.xlu0 %v366
    %v368 = vpop.xlane.xlu0 %367
    %v369 = vsel %vm314, %v352, 0.0
    %370 = vadd.xlane.f32.xlu0 %v369
    %v371 = vpop.xlane.xlu0 %370
    %v372 = vsel %vm314, %v354, 0.0
    %373 = vadd.xlane.f32.xlu0 %v372
    %v374 = vpop.xlane.xlu0 %373
    %v375 = vsel %vm314, %v356, 0.0
    %376 = vadd.xlane.f32.xlu0 %v375
    %v377 = vpop.xlane.xlu0 %376
    %v378 = vsel %vm314, %v358, 0.0
    %379 = vadd.xlane.f32.xlu0 %v378
    %v380 = vpop.xlane.xlu0 %379
    %v381 = vsel %vm314, %v360, 0.0
    %382 = vadd.xlane.f32.xlu0 %v381
    %v383 = vpop.xlane.xlu0 %382
    %v384 = vsel %vm314, %v362, 0.0
    %385 = vadd.xlane.f32.xlu0 %v384
    %v386 = vpop.xlane.xlu0 %385
    %v387 = vrcp.pop %v365
    %v388 = vmul.f32 %v348, %v387
    %v389 = vrcp.pop %v368
    %v390 = vmul.f32 %v350, %v389
    %v391 = vrcp.pop %v371
    %v392 = vmul.f32 %v352, %v391
    %v393 = vrcp.pop %v374
    %v394 = vmul.f32 %v354, %v393
    %v395 = vrcp.pop %v377
    %v396 = vmul.f32 %v356, %v395
    %v397 = vrcp.pop %v380
    %v398 = vmul.f32 %v358, %v397
    %v399 = vrcp.pop %v383
    %v400 = vmul.f32 %v360, %v399
    %v401 = vrcp.pop %v386
    %v402 = vmul.f32 %v362, %v401
    %v403 = vpack.c.bf16 %v390, %v388
    %v404 = vpack.c.bf16 %v394, %v392
    %v405 = vpack.c.bf16 %v398, %v396
    %v406 = vpack.c.bf16 %v402, %v400
    %v407 = vpack.c.bf16 %v218, %v217
    %v408 = vpack.c.bf16 %v220, %v219
    %v409 = vpack.c.bf16 %v222, %v221
    %v410 = vpack.c.bf16 %v224, %v223
    %415 = vrot.lane.b32.xlu0 %v407, 64
    %v416 = vpop.permute.xlu0 %415
    %417 = vrot.lane.b32.xlu0 %v408, 64
    %v418 = vpop.permute.xlu0 %417
    %419 = vrot.lane.b32.xlu0 %v409, 64
    %v420 = vpop.permute.xlu0 %419
    %421 = vrot.lane.b32.xlu0 %v410, 64
    %v422 = vpop.permute.xlu0 %421
    %v428 = vsel %vm314, %v403, 0
    %v431 = vsel %vm314, %v404, 0
    %v434 = vsel %vm314, %v405, 0
    %v437 = vsel %vm314, %v406, 0
    %439 = vmatprep.subr.bf16.mxu0 0
    %440 = vmatpush1.bf16.msra.mxu0 %v416
    %441 = vmatprep.subr.bf16.mxu0 0
    %442 = vmatpush1.bf16.msra.mxu0 %v418
    %443 = vmatprep.subr.bf16.mxu0 0
    %444 = vmatpush1.bf16.msra.mxu0 %v420
    %445 = vmatprep.subr.bf16.mxu0 0
    %446 = vmatpush1.bf16.msra.mxu0 %v422
    %447 = vmatprep.subr.bf16.mxu0 0
    %448 = vmatpush1.bf16.msra.mxu0 0
    %449 = vmatprep.subr.bf16.mxu0 0
    %450 = vmatpush1.bf16.msra.mxu0 0
    %451 = vmatprep.subr.bf16.mxu0 0
    %452 = vmatpush1.bf16.msra.mxu0 0
    %453 = vmatprep.subr.bf16.mxu0 0
    %454 = vmatpush1.bf16.msra.mxu0 0
    %455 = vmatprep.subr.bf16.mxu0 0
    %456 = vmatpush1.bf16.msra.mxu0 0
    %457 = vmatprep.subr.bf16.mxu0 0
    %458 = vmatpush1.bf16.msra.mxu0 0
    %459 = vmatprep.subr.bf16.mxu0 0
    %460 = vmatpush1.bf16.msra.mxu0 0
    %461 = vmatprep.subr.bf16.mxu0 0
    %462 = vmatpush1.bf16.msra.mxu0 0
    %463 = vmatprep.subr.bf16.mxu0 0
    %464 = vmatpush1.bf16.msra.mxu0 0
    %465 = vmatprep.subr.bf16.mxu0 0
    %466 = vmatpush1.bf16.msra.mxu0 0
    %467 = vmatprep.subr.bf16.mxu0 0
    %468 = vmatpush1.bf16.msra.mxu0 0
    %469 = vmatprep.subr.bf16.mxu0 0
    %470 = vmatpush1.bf16.msra.mxu0 0
    %471 = vmatprep.mubr.bf16.mxu0 0
    %472 = vmatmul.mubr.bf16.gmra.mrb[0].mxu0 %v428
    %v473 = vpop.f32.mrb[0].mxu0
    %v474 = vadd.f32 0.0, %v473
    %v475 = vpop.f32.mrb[0].mxu0
    %v476 = vpop.f32.mrb[0].mxu0
    %v477 = vadd.f32 0.0, %v476
    %v478 = vpop.f32.mrb[0].mxu0
    %479 = vmatprep.mubr.bf16.mxu0 0
    %480 = vmatmul.mubr.bf16.gmra.mrb[0].mxu0 %v431
    %v481 = vpop.f32.mrb[0].mxu0
    %v482 = vadd.f32 0.0, %v481
    %v483 = vpop.f32.mrb[0].mxu0
    %v484 = vpop.f32.mrb[0].mxu0
    %v485 = vadd.f32 0.0, %v484
    %v486 = vpop.f32.mrb[0].mxu0
    %487 = vmatprep.mubr.bf16.mxu0 0
    %488 = vmatmul.mubr.bf16.gmra.mrb[0].mxu0 %v434
    %v489 = vpop.f32.mrb[0].mxu0
    %v490 = vadd.f32 0.0, %v489
    %v491 = vpop.f32.mrb[0].mxu0
    %v492 = vpop.f32.mrb[0].mxu0
    %v493 = vadd.f32 0.0, %v492
    %v494 = vpop.f32.mrb[0].mxu0
    %495 = vmatprep.mubr.bf16.mxu0 0
    %496 = vmatmul.mubr.bf16.gmra.mrb[0].mxu0 %v437
    %v497 = vpop.f32.mrb[0].mxu0
    %v498 = vadd.f32 0.0, %v497
    %v499 = vpop.f32.mrb[0].mxu0
    %v500 = vpop.f32.mrb[0].mxu0
    %v501 = vadd.f32 0.0, %v500
    %v502 = vpop.f32.mrb[0].mxu0
    %503 = vdwg.mxu0
    %v504 = vadd.f32 %v474, %v482
    %v505 = vadd.f32 %v477, %v485
    %v506 = vadd.f32 %v504, %v490
    %v507 = vadd.f32 %v505, %v493
    %v508 = vadd.f32 %v506, %v498
    %v509 = vadd.f32 %v507, %v501
    %v510 = vpack.c.bf16 %v509, %v508
    %v511 = vld [vmem:[%s4] sm:$0xf]
    %v512 = vld [vmem:[%s4 + $0x4] sm:$0xf]
    %v513 = vld [vmem:[%s4 + $0x8] sm:$0xf]
    %v514 = vld [vmem:[%s4 + $0xc] sm:$0xf]
    %v519 = vunpack.c.l.b16 %v511
    %v520 = vunpack.c.l.b16 %v512
    %v521 = vunpack.c.l.b16 %v513
    %v522 = vunpack.c.l.b16 %v514
    %v523 = vpack.c.b16 %v520, %v519
    %v524 = vpack.c.b16 %v522, %v521
    %v528 = vsel %vm60, %v510, 0
    %530 = vmatprep.subr.bf16.mxu0 0
    %531 = vmatpush1.bf16.msra.mxu0 %v523
    %532 = vmatprep.subr.bf16.mxu0 0
    %533 = vmatpush1.bf16.msra.mxu0 %v524
    %534 = vmatprep.subr.bf16.mxu0 0
    %535 = vmatpush1.bf16.msra.mxu0 0
    %536 = vmatprep.subr.bf16.mxu0 0
    %537 = vmatpush1.bf16.msra.mxu0 0
    %538 = vmatprep.subr.bf16.mxu0 0
    %539 = vmatpush1.bf16.msra.mxu0 0
    %540 = vmatprep.subr.bf16.mxu0 0
    %541 = vmatpush1.bf16.msra.mxu0 0
    %542 = vmatprep.subr.bf16.mxu0 0
    %543 = vmatpush1.bf16.msra.mxu0 0
    %544 = vmatprep.subr.bf16.mxu0 0
    %545 = vmatpush1.bf16.msra.mxu0 0
    %546 = vmatprep.subr.bf16.mxu0 0
    %547 = vmatpush1.bf16.msra.mxu0 0
    %548 = vmatprep.subr.bf16.mxu0 0
    %549 = vmatpush1.bf16.msra.mxu0 0
    %550 = vmatprep.subr.bf16.mxu0 0
    %551 = vmatpush1.bf16.msra.mxu0 0
    %552 = vmatprep.subr.bf16.mxu0 0
    %553 = vmatpush1.bf16.msra.mxu0 0
    %554 = vmatprep.subr.bf16.mxu0 0
    %555 = vmatpush1.bf16.msra.mxu0 0
    %556 = vmatprep.subr.bf16.mxu0 0
    %557 = vmatpush1.bf16.msra.mxu0 0
    %558 = vmatprep.subr.bf16.mxu0 0
    %559 = vmatpush1.bf16.msra.mxu0 0
    %560 = vmatprep.subr.bf16.mxu0 0
    %561 = vmatpush1.bf16.msra.mxu0 0
    %562 = vmatprep.mubr.bf16.mxu0 0
    %563 = vmatmul.mubr.bf16.gmra.mrb[0].mxu0 %v528
    %v564 = vpop.f32.mrb[0].mxu0
    %v565 = vadd.f32 0.0, %v564
    %v566 = vpop.f32.mrb[0].mxu0
    %v567 = vpop.f32.mrb[0].mxu0
    %v568 = vadd.f32 0.0, %v567
    %v569 = vpop.f32.mrb[0].mxu0
    %570 = vdwg.mxu0
    %v571 = vadd.f32 %v55, %v565
    %v572 = vadd.f32 %v56, %v568
    %v573 = vld [vmem:[%s5] sm:$0x1]
    %v574 = vmul.f32 %v571, %v571
    %v575 = vmul.f32 %v572, %v572
    %v576 = vsel %vm60, %v574, 0.0
    %577 = vadd.xlane.f32.xlu0 %v576
    %v578 = vpop.xlane.xlu0 %577
    %v579 = vsel %vm60, %v575, 0.0
    %580 = vadd.xlane.f32.xlu0 %v579
    %v581 = vpop.xlane.xlu0 %580
    %v582 = vmul.f32 %v578, %v67
    %v583 = vmul.f32 %v581, %v67
    %v584 = vadd.f32 %v582, 1e-06
    %v585 = vadd.f32 %v583, 1e-06
    %v586 = vrsqrt.pop %v584
    %v587 = vrsqrt.pop %v585
    %v588 = vmul.f32 %v571, %v586
    %v589 = vmul.f32 %v572, %v587
    %v591 = vlaneseq
    %v592 = vshrl.u32 %v591, 7
    %v593 = vsub.s32 0, %v592
    %v594 = vrot.slane %v573, %v593
    %v596 = vmul.f32 %v588, %v594
    %v597 = vmul.f32 %v589, %v594
    %v598 = vld [vmem:[%s6] sm:$0xff]
    %v599 = vld [vmem:[%s6 + $0x8] sm:$0xff]
    %v600 = vld [vmem:[%s6 + $0x10] sm:$0xff]
    %v601 = vld [vmem:[%s6 + $0x18] sm:$0xff]
    %v603 = vsel %vm60, %v596, 0
    %v606 = vsel %vm60, %v597, 0
    %608 = vmatprep.subr.mxu0 0.0
    %609 = vmatpush1.msra.mxu0 %v598
    %610 = vmatprep.subr.mxu0 0.0
    %611 = vmatpush1.msra.mxu0 %v599
    %612 = vmatprep.subr.mxu0 0.0
    %613 = vmatpush1.msra.mxu0 %v600
    %614 = vmatprep.subr.mxu0 0.0
    %615 = vmatpush1.msra.mxu0 %v601
    %616 = vmatprep.subr.mxu0 0.0
    %617 = vmatpush1.msra.mxu0 0.0
    %618 = vmatprep.subr.mxu0 0.0
    %619 = vmatpush1.msra.mxu0 0.0
    %620 = vmatprep.subr.mxu0 0.0
    %621 = vmatpush1.msra.mxu0 0.0
    %622 = vmatprep.subr.mxu0 0.0
    %623 = vmatpush1.msra.mxu0 0.0
    %624 = vmatprep.subr.mxu0 0.0
    %625 = vmatpush1.msra.mxu0 0.0
    %626 = vmatprep.subr.mxu0 0.0
    %627 = vmatpush1.msra.mxu0 0.0
    %628 = vmatprep.subr.mxu0 0.0
    %629 = vmatpush1.msra.mxu0 0.0
    %630 = vmatprep.subr.mxu0 0.0
    %631 = vmatpush1.msra.mxu0 0.0
    %632 = vmatprep.subr.mxu0 0.0
    %633 = vmatpush1.msra.mxu0 0.0
    %634 = vmatprep.subr.mxu0 0.0
    %635 = vmatpush1.msra.mxu0 0.0
    %636 = vmatprep.subr.mxu0 0.0
    %637 = vmatpush1.msra.mxu0 0.0
    %638 = vmatprep.subr.mxu0 0.0
    %639 = vmatpush1.msra.mxu0 0.0
    %640 = vmatprep.subr.mxu0 0.0
    %641 = vmatpush1.msra.mxu0 0.0
    %642 = vmatprep.subr.mxu0 0.0
    %643 = vmatpush1.msra.mxu0 0.0
    %644 = vmatprep.subr.mxu0 0.0
    %645 = vmatpush1.msra.mxu0 0.0
    %646 = vmatprep.subr.mxu0 0.0
    %647 = vmatpush1.msra.mxu0 0.0
    %648 = vmatprep.subr.mxu0 0.0
    %649 = vmatpush1.msra.mxu0 0.0
    %650 = vmatprep.subr.mxu0 0.0
    %651 = vmatpush1.msra.mxu0 0.0
    %652 = vmatprep.subr.mxu0 0.0
    %653 = vmatpush1.msra.mxu0 0.0
    %654 = vmatprep.subr.mxu0 0.0
    %655 = vmatpush1.msra.mxu0 0.0
    %656 = vmatprep.subr.mxu0 0.0
    %657 = vmatpush1.msra.mxu0 0.0
    %658 = vmatprep.subr.mxu0 0.0
    %659 = vmatpush1.msra.mxu0 0.0
    %660 = vmatprep.subr.mxu0 0.0
    %661 = vmatpush1.msra.mxu0 0.0
    %662 = vmatprep.subr.mxu0 0.0
    %663 = vmatpush1.msra.mxu0 0.0
    %664 = vmatprep.subr.mxu0 0.0
    %665 = vmatpush1.msra.mxu0 0.0
    %666 = vmatprep.subr.mxu0 0.0
    %667 = vmatpush1.msra.mxu0 0.0
    %668 = vmatprep.subr.mxu0 0.0
    %669 = vmatpush1.msra.mxu0 0.0
    %670 = vmatprep.subr.mxu0 0.0
    %671 = vmatpush1.msra.mxu0 0.0
    %672 = vmatprep.mubr.f32.mxu0 0.0
    %673 = vmatmul.mubr.f32.gmra.mrb[0].mxu0 %v603
    %v674 = vpop.f32.mrb[0].mxu0
    %v675 = vadd.f32 0.0, %v674
    %v676 = vpop.f32.mrb[0].mxu0
    %677 = vmatprep.mubr.f32.mxu0 0.0
    %678 = vmatmul.mubr.f32.gmra.mrb[0].mxu0 %v606
    %v679 = vpop.f32.mrb[0].mxu0
    %v680 = vadd.f32 0.0, %v679
    %v681 = vpop.f32.mrb[0].mxu0
    %682 = vdwg.mxu0
    %vm683 = vcmask 130048
    %v684 = vsel %vm683, %v675, -inf
    %685 = vmax.xlane.f32.xlu0 %v684
    %v686 = vpop.xlane.xlu0 %685
    %v687 = vsel %vm683, %v680, -inf
    %688 = vmax.xlane.f32.xlu0 %v687
    %v689 = vpop.xlane.xlu0 %688
    %v690 = vsub.f32 %v675, %v686
    %v691 = vsub.f32 %v680, %v689
    %v692 = vmul.f32 %v690, 1.442695
    %v693 = vpow.pop %v692
    %v694 = vmul.f32 %v691, 1.442695
    %v695 = vpow.pop %v694
    %v696 = vsel %vm683, %v693, 0.0
    %697 = vadd.xlane.f32.xlu0 %v696
    %v698 = vpop.xlane.xlu0 %697
    %v699 = vsel %vm683, %v695, 0.0
    %700 = vadd.xlane.f32.xlu0 %v699
    %v701 = vpop.xlane.xlu0 %700
    %v702 = vrcp.pop %v698
    %v703 = vmul.f32 %v693, %v702
    %v704 = vrcp.pop %v701
    %v705 = vmul.f32 %v695, %v704
    %v706 = vlaneseq
    %v707 = vand.u32 %v706, 127
    %v708 = vcvt.s32.f32 %v707
    %v709 = vsel %vm683, %v703, -inf
    %710 = vmax.xlane.f32.xlu0 %v709
    %v711 = vpop.xlane.xlu0 %710
    %v712 = vsel %vm683, %v705, -inf
    %713 = vmax.xlane.f32.xlu0 %v712
    %v714 = vpop.xlane.xlu0 %713
    %vm715 = vcmp.eq.f32.partialorder %v703, %v711
    %vm716 = vcmp.eq.f32.partialorder %v705, %v714
    %v717 = vsel %vm715, %v708, 16.0
    %v718 = vsel %vm716, %v708, 16.0
    %v719 = vsel %vm683, %v717, inf
    %720 = vmin.xlane.f32.xlu0 %v719
    %v721 = vpop.xlane.xlu0 %720
    %v722 = vsel %vm683, %v718, inf
    %723 = vmin.xlane.f32.xlu0 %v722
    %v724 = vpop.xlane.xlu0 %723
    %vm725 = vcmp.eq.f32.partialorder %v708, %v721
    %vm726 = vcmp.eq.f32.partialorder %v708, %v724
    %v727 = vsel %vm725, 1, 0
    %v728 = vsel %vm726, 1, 0
    %v729 = vcvt.s32.f32 %v727
    %v730 = vcvt.s32.f32 %v728
    %v731 = vsub.f32 1.0, %v729
    %v732 = vsub.f32 1.0, %v730
    %v733 = vmul.f32 %v703, %v731
    %v734 = vmul.f32 %v705, %v732
    %v735 = vsel %vm683, %v733, -inf
    %736 = vmax.xlane.f32.xlu0 %v735
    %v737 = vpop.xlane.xlu0 %736
    %v738 = vsel %vm683, %v734, -inf
    %739 = vmax.xlane.f32.xlu0 %v738
    %v740 = vpop.xlane.xlu0 %739
    %vm741 = vcmp.eq.f32.partialorder %v733, %v737
    %vm742 = vcmp.eq.f32.partialorder %v734, %v740
    %v743 = vsel %vm741, %v708, 16.0
    %v744 = vsel %vm742, %v708, 16.0
    %v745 = vsel %vm683, %v743, inf
    %746 = vmin.xlane.f32.xlu0 %v745
    %v747 = vpop.xlane.xlu0 %746
    %v748 = vsel %vm683, %v744, inf
    %749 = vmin.xlane.f32.xlu0 %v748
    %v750 = vpop.xlane.xlu0 %749
    %vm751 = vcmp.eq.f32.partialorder %v708, %v747
    %vm752 = vcmp.eq.f32.partialorder %v708, %v750
    %v753 = vsel %vm751, 1, 0
    %v754 = vsel %vm752, 1, 0
    %v755 = vcvt.s32.f32 %v753
    %v756 = vcvt.s32.f32 %v754
    %v757 = vadd.f32 %v711, %v737
    %v758 = vadd.f32 %v714, %v740
    %v759 = vadd.f32 %v757, 1e-09
    %v760 = vadd.f32 %v758, 1e-09
    %v761 = vrcp.pop %v759
    %v762 = vmul.f32 %v711, %v761
    %v763 = vrcp.pop %v760
    %v764 = vmul.f32 %v714, %v763
    %v765 = vmul.f32 %v737, %v761
    %v766 = vmul.f32 %v740, %v763
    %v767 = vld [vmem:[%s13] sm:$0x3]
    %v769 = vsel %vm683, %v767, 0
    %771 = vmatprep.subr.mxu0 0.0
    %772 = vmatpush1.msra.mxu0 %v729
    %773 = vmatprep.subr.mxu0 0.0
    %774 = vmatpush1.msra.mxu0 %v730
    %775 = vmatprep.subr.mxu0 0.0
    %776 = vmatpush1.msra.mxu0 0.0
    %777 = vmatprep.subr.mxu0 0.0
    %778 = vmatpush1.msra.mxu0 0.0
    %779 = vmatprep.subr.mxu0 0.0
    %780 = vmatpush1.msra.mxu0 0.0
    %781 = vmatprep.subr.mxu0 0.0
    %782 = vmatpush1.msra.mxu0 0.0
    %783 = vmatprep.subr.mxu0 0.0
    %784 = vmatpush1.msra.mxu0 0.0
    %785 = vmatprep.subr.mxu0 0.0
    %786 = vmatpush1.msra.mxu0 0.0
    %787 = vmatprep.subr.mxu0 0.0
    %788 = vmatpush1.msra.mxu0 0.0
    %789 = vmatprep.subr.mxu0 0.0
    %790 = vmatpush1.msra.mxu0 0.0
    %791 = vmatprep.subr.mxu0 0.0
    %792 = vmatpush1.msra.mxu0 0.0
    %793 = vmatprep.subr.mxu0 0.0
    %794 = vmatpush1.msra.mxu0 0.0
    %795 = vmatprep.subr.mxu0 0.0
    %796 = vmatpush1.msra.mxu0 0.0
    %797 = vmatprep.subr.mxu0 0.0
    %798 = vmatpush1.msra.mxu0 0.0
    %799 = vmatprep.subr.mxu0 0.0
    %800 = vmatpush1.msra.mxu0 0.0
    %801 = vmatprep.subr.mxu0 0.0
    %802 = vmatpush1.msra.mxu0 0.0
    %803 = vmatprep.subr.mxu0 0.0
    %804 = vmatpush1.msra.mxu0 0.0
    %805 = vmatprep.subr.mxu0 0.0
    %806 = vmatpush1.msra.mxu0 0.0
    %807 = vmatprep.subr.mxu0 0.0
    %808 = vmatpush1.msra.mxu0 0.0
    %809 = vmatprep.subr.mxu0 0.0
    %810 = vmatpush1.msra.mxu0 0.0
    %811 = vmatprep.subr.mxu0 0.0
    %812 = vmatpush1.msra.mxu0 0.0
    %813 = vmatprep.subr.mxu0 0.0
    %814 = vmatpush1.msra.mxu0 0.0
    %815 = vmatprep.subr.mxu0 0.0
    %816 = vmatpush1.msra.mxu0 0.0
    %817 = vmatprep.subr.mxu0 0.0
    %818 = vmatpush1.msra.mxu0 0.0
    %819 = vmatprep.subr.mxu0 0.0
    %820 = vmatpush1.msra.mxu0 0.0
    %821 = vmatprep.subr.mxu0 0.0
    %822 = vmatpush1.msra.mxu0 0.0
    %823 = vmatprep.subr.mxu0 0.0
    %824 = vmatpush1.msra.mxu0 0.0
    %825 = vmatprep.subr.mxu0 0.0
    %826 = vmatpush1.msra.mxu0 0.0
    %827 = vmatprep.subr.mxu0 0.0
    %828 = vmatpush1.msra.mxu0 0.0
    %829 = vmatprep.subr.mxu0 0.0
    %830 = vmatpush1.msra.mxu0 0.0
    %831 = vmatprep.subr.mxu0 0.0
    %832 = vmatpush1.msra.mxu0 0.0
    %833 = vmatprep.subr.mxu0 0.0
    %834 = vmatpush1.msra.mxu0 0.0
    %835 = vmatprep.mubr.f32.mxu0 0.0
    %836 = vmatmul.mubr.f32.gmra.mrb[0].mxu0 %v769
    %v837 = vpop.f32.mrb[0].mxu0
    %v838 = vadd.f32 0.0, %v837
    %v839 = vpop.f32.mrb[0].mxu0
    %840 = vdwg.mxu0
    %v841 = vmul.f32 %v838, 0.125
    %842 = vmatprep.subr.mxu0 0.0
    %843 = vmatpush1.msra.mxu0 %v703
    %844 = vmatprep.subr.mxu0 0.0
    %845 = vmatpush1.msra.mxu0 %v705
    %846 = vmatprep.subr.mxu0 0.0
    %847 = vmatpush1.msra.mxu0 0.0
    %848 = vmatprep.subr.mxu0 0.0
    %849 = vmatpush1.msra.mxu0 0.0
    %850 = vmatprep.subr.mxu0 0.0
    %851 = vmatpush1.msra.mxu0 0.0
    %852 = vmatprep.subr.mxu0 0.0
    %853 = vmatpush1.msra.mxu0 0.0
    %854 = vmatprep.subr.mxu0 0.0
    %855 = vmatpush1.msra.mxu0 0.0
    %856 = vmatprep.subr.mxu0 0.0
    %857 = vmatpush1.msra.mxu0 0.0
    %858 = vmatprep.subr.mxu0 0.0
    %859 = vmatpush1.msra.mxu0 0.0
    %860 = vmatprep.subr.mxu0 0.0
    %861 = vmatpush1.msra.mxu0 0.0
    %862 = vmatprep.subr.mxu0 0.0
    %863 = vmatpush1.msra.mxu0 0.0
    %864 = vmatprep.subr.mxu0 0.0
    %865 = vmatpush1.msra.mxu0 0.0
    %866 = vmatprep.subr.mxu0 0.0
    %867 = vmatpush1.msra.mxu0 0.0
    %868 = vmatprep.subr.mxu0 0.0
    %869 = vmatpush1.msra.mxu0 0.0
    %870 = vmatprep.subr.mxu0 0.0
    %871 = vmatpush1.msra.mxu0 0.0
    %872 = vmatprep.subr.mxu0 0.0
    %873 = vmatpush1.msra.mxu0 0.0
    %874 = vmatprep.subr.mxu0 0.0
    %875 = vmatpush1.msra.mxu0 0.0
    %876 = vmatprep.subr.mxu0 0.0
    %877 = vmatpush1.msra.mxu0 0.0
    %878 = vmatprep.subr.mxu0 0.0
    %879 = vmatpush1.msra.mxu0 0.0
    %880 = vmatprep.subr.mxu0 0.0
    %881 = vmatpush1.msra.mxu0 0.0
    %882 = vmatprep.subr.mxu0 0.0
    %883 = vmatpush1.msra.mxu0 0.0
    %884 = vmatprep.subr.mxu0 0.0
    %885 = vmatpush1.msra.mxu0 0.0
    %886 = vmatprep.subr.mxu0 0.0
    %887 = vmatpush1.msra.mxu0 0.0
    %888 = vmatprep.subr.mxu0 0.0
    %889 = vmatpush1.msra.mxu0 0.0
    %890 = vmatprep.subr.mxu0 0.0
    %891 = vmatpush1.msra.mxu0 0.0
    %892 = vmatprep.subr.mxu0 0.0
    %893 = vmatpush1.msra.mxu0 0.0
    %894 = vmatprep.subr.mxu0 0.0
    %895 = vmatpush1.msra.mxu0 0.0
    %896 = vmatprep.subr.mxu0 0.0
    %897 = vmatpush1.msra.mxu0 0.0
    %898 = vmatprep.subr.mxu0 0.0
    %899 = vmatpush1.msra.mxu0 0.0
    %900 = vmatprep.subr.mxu0 0.0
    %901 = vmatpush1.msra.mxu0 0.0
    %902 = vmatprep.subr.mxu0 0.0
    %903 = vmatpush1.msra.mxu0 0.0
    %904 = vmatprep.subr.mxu0 0.0
    %905 = vmatpush1.msra.mxu0 0.0
    %906 = vmatprep.mubr.f32.mxu0 0.0
    %907 = vmatmul.mubr.f32.gmra.mrb[0].mxu0 %v769
    %v908 = vpop.f32.mrb[0].mxu0
    %v909 = vadd.f32 0.0, %v908
    %v910 = vpop.f32.mrb[0].mxu0
    %911 = vdwg.mxu0
    %v912 = vmul.f32 %v909, 0.125
    %v913 = vmul.f32 %v841, %v912
    %vm914 = vcmask 123904
    %v915 = vsel %vm914, %v913, 0.0
    %916 = vadd.xlane.f32.xlu0 %v915
    %v917 = vpop.xlane.xlu0 %916
    %vm918 = vcmask 1041408
    %v919 = vsel %vm918, %v917, 0.0
    %v920 = vrot.slane %v919, 4
    %v921 = vadd.f32 %v919, %v920
    %v922 = vrot.slane %v921, 2
    %v923 = vadd.f32 %v921, %v922
    %v924 = vrot.slane %v923, 1
    %v925 = vadd.f32 %v923, %v924
    %v926 = vmul.f32 %v925, 8.0
    %vm927 = vcmask 0
    %928 = vst.msk [vmem:[#allocation4] sm:$0x1] %vm927, %v926
    %v929 = vld [vmem:[%s1] sm:$0xff]
    %v930 = vld [vmem:[%s1 + $0x8] sm:$0xff]
    %v931 = vmul.f32 %v765, 5.0
    %v932 = vmul.f32 %v766, 5.0
    %vm933 = vcmp.lt.f32.partialorder %v929, %v931
    %vm934 = vcmp.lt.f32.partialorder %v930, %v932
    %v935 = vsel %vm933, 1, 0
    %v936 = vsel %vm934, 1, 0
    %v937 = vcvt.s32.f32 %v935
    %v938 = vcvt.s32.f32 %v936
    %940 = vset.pattern.permute.xlu0 0
    %941 = vperm.xlu0 %940, %v937
    %v942 = vpop.permute.xlu0 %941
    %945 = vset.pattern.permute.xlu0 0
    %946 = vperm.xlu0 %945, %v938
    %v947 = vpop.permute.xlu0 %946
    %v949 = vmul.f32 %v755, %v942
    %v950 = vmul.f32 %v756, %v947
    %v951 = vld [vmem:[%s11] sm:$0xff]
    %v952 = vld [vmem:[%s11 + $0x8] sm:$0xff]
    %v953 = vld [vmem:[%s12] sm:$0xff]
    %v954 = vld [vmem:[%s12 + $0x8] sm:$0xff]
    %v956 = vsel %vm683, %v951, 0
    %v959 = vsel %vm683, %v952, 0
    %961 = vmatprep.subr.mxu0 0.0
    %962 = vmatpush1.msra.mxu0 %v729
    %963 = vmatprep.subr.mxu0 0.0
    %964 = vmatpush1.msra.mxu0 %v730
    %965 = vmatprep.subr.mxu0 0.0
    %966 = vmatpush1.msra.mxu0 0.0
    %967 = vmatprep.subr.mxu0 0.0
    %968 = vmatpush1.msra.mxu0 0.0
    %969 = vmatprep.subr.mxu0 0.0
    %970 = vmatpush1.msra.mxu0 0.0
    %971 = vmatprep.subr.mxu0 0.0
    %972 = vmatpush1.msra.mxu0 0.0
    %973 = vmatprep.subr.mxu0 0.0
    %974 = vmatpush1.msra.mxu0 0.0
    %975 = vmatprep.subr.mxu0 0.0
    %976 = vmatpush1.msra.mxu0 0.0
    %977 = vmatprep.subr.mxu0 0.0
    %978 = vmatpush1.msra.mxu0 0.0
    %979 = vmatprep.subr.mxu0 0.0
    %980 = vmatpush1.msra.mxu0 0.0
    %981 = vmatprep.subr.mxu0 0.0
    %982 = vmatpush1.msra.mxu0 0.0
    %983 = vmatprep.subr.mxu0 0.0
    %984 = vmatpush1.msra.mxu0 0.0
    %985 = vmatprep.subr.mxu0 0.0
    %986 = vmatpush1.msra.mxu0 0.0
    %987 = vmatprep.subr.mxu0 0.0
    %988 = vmatpush1.msra.mxu0 0.0
    %989 = vmatprep.subr.mxu0 0.0
    %990 = vmatpush1.msra.mxu0 0.0
    %991 = vmatprep.subr.mxu0 0.0
    %992 = vmatpush1.msra.mxu0 0.0
    %993 = vmatprep.subr.mxu0 0.0
    %994 = vmatpush1.msra.mxu0 0.0
    %995 = vmatprep.subr.mxu0 0.0
    %996 = vmatpush1.msra.mxu0 0.0
    %997 = vmatprep.subr.mxu0 0.0
    %998 = vmatpush1.msra.mxu0 0.0
    %999 = vmatprep.subr.mxu0 0.0
    %1000 = vmatpush1.msra.mxu0 0.0
    %1001 = vmatprep.subr.mxu0 0.0
    %1002 = vmatpush1.msra.mxu0 0.0
    %1003 = vmatprep.subr.mxu0 0.0
    %1004 = vmatpush1.msra.mxu0 0.0
    %1005 = vmatprep.subr.mxu0 0.0
    %1006 = vmatpush1.msra.mxu0 0.0
    %1007 = vmatprep.subr.mxu0 0.0
    %1008 = vmatpush1.msra.mxu0 0.0
    %1009 = vmatprep.subr.mxu0 0.0
    %1010 = vmatpush1.msra.mxu0 0.0
    %1011 = vmatprep.subr.mxu0 0.0
    %1012 = vmatpush1.msra.mxu0 0.0
    %1013 = vmatprep.subr.mxu0 0.0
    %1014 = vmatpush1.msra.mxu0 0.0
    %1015 = vmatprep.subr.mxu0 0.0
    %1016 = vmatpush1.msra.mxu0 0.0
    %1017 = vmatprep.subr.mxu0 0.0
    %1018 = vmatpush1.msra.mxu0 0.0
    %1019 = vmatprep.subr.mxu0 0.0
    %1020 = vmatpush1.msra.mxu0 0.0
    %1021 = vmatprep.subr.mxu0 0.0
    %1022 = vmatpush1.msra.mxu0 0.0
    %1023 = vmatprep.subr.mxu0 0.0
    %1024 = vmatpush1.msra.mxu0 0.0
    %1025 = vmatprep.mubr.f32.mxu0 0.0
    %1026 = vmatmul.mubr.f32.gmra.mrb[0].mxu0 %v956
    %v1027 = vpop.f32.mrb[0].mxu0
    %v1028 = vadd.f32 0.0, %v1027
    %v1029 = vpop.f32.mrb[0].mxu0
    %1030 = vmatprep.mubr.f32.mxu0 0.0
    %1031 = vmatmul.mubr.f32.gmra.mrb[0].mxu0 %v959
    %v1032 = vpop.f32.mrb[0].mxu0
    %v1033 = vadd.f32 0.0, %v1032
    %v1034 = vpop.f32.mrb[0].mxu0
    %1035 = vdwg.mxu0
    %v1036 = vmul.f32 %v1028, %v729
    %v1037 = vmul.f32 %v1033, %v730
    %vm1038 = vcmp.lt.f32.partialorder %v1036, 4.0
    %vm1039 = vcmp.lt.f32.partialorder %v1037, 4.0
    %v1040 = vsel %vm1038, 1, 0
    %v1041 = vsel %vm1039, 1, 0
    %v1042 = vcvt.s32.f32 %v1040
    %v1043 = vcvt.s32.f32 %v1041
    %v1044 = vmul.f32 %v729, %v1042
    %v1045 = vmul.f32 %v730, %v1043
    %v1047 = vsel %vm683, %v953, 0
    %v1050 = vsel %vm683, %v954, 0
    %1052 = vmatprep.subr.mxu0 0.0
    %1053 = vmatpush1.msra.mxu0 %v1044
    %1054 = vmatprep.subr.mxu0 0.0
    %1055 = vmatpush1.msra.mxu0 %v1045
    %1056 = vmatprep.subr.mxu0 0.0
    %1057 = vmatpush1.msra.mxu0 0.0
    %1058 = vmatprep.subr.mxu0 0.0
    %1059 = vmatpush1.msra.mxu0 0.0
    %1060 = vmatprep.subr.mxu0 0.0
    %1061 = vmatpush1.msra.mxu0 0.0
    %1062 = vmatprep.subr.mxu0 0.0
    %1063 = vmatpush1.msra.mxu0 0.0
    %1064 = vmatprep.subr.mxu0 0.0
    %1065 = vmatpush1.msra.mxu0 0.0
    %1066 = vmatprep.subr.mxu0 0.0
    %1067 = vmatpush1.msra.mxu0 0.0
    %1068 = vmatprep.subr.mxu0 0.0
    %1069 = vmatpush1.msra.mxu0 0.0
    %1070 = vmatprep.subr.mxu0 0.0
    %1071 = vmatpush1.msra.mxu0 0.0
    %1072 = vmatprep.subr.mxu0 0.0
    %1073 = vmatpush1.msra.mxu0 0.0
    %1074 = vmatprep.subr.mxu0 0.0
    %1075 = vmatpush1.msra.mxu0 0.0
    %1076 = vmatprep.subr.mxu0 0.0
    %1077 = vmatpush1.msra.mxu0 0.0
    %1078 = vmatprep.subr.mxu0 0.0
    %1079 = vmatpush1.msra.mxu0 0.0
    %1080 = vmatprep.subr.mxu0 0.0
    %1081 = vmatpush1.msra.mxu0 0.0
    %1082 = vmatprep.subr.mxu0 0.0
    %1083 = vmatpush1.msra.mxu0 0.0
    %1084 = vmatprep.subr.mxu0 0.0
    %1085 = vmatpush1.msra.mxu0 0.0
    %1086 = vmatprep.subr.mxu0 0.0
    %1087 = vmatpush1.msra.mxu0 0.0
    %1088 = vmatprep.subr.mxu0 0.0
    %1089 = vmatpush1.msra.mxu0 0.0
    %1090 = vmatprep.subr.mxu0 0.0
    %1091 = vmatpush1.msra.mxu0 0.0
    %1092 = vmatprep.subr.mxu0 0.0
    %1093 = vmatpush1.msra.mxu0 0.0
    %1094 = vmatprep.subr.mxu0 0.0
    %1095 = vmatpush1.msra.mxu0 0.0
    %1096 = vmatprep.subr.mxu0 0.0
    %1097 = vmatpush1.msra.mxu0 0.0
    %1098 = vmatprep.subr.mxu0 0.0
    %1099 = vmatpush1.msra.mxu0 0.0
    %1100 = vmatprep.subr.mxu0 0.0
    %1101 = vmatpush1.msra.mxu0 0.0
    %1102 = vmatprep.subr.mxu0 0.0
    %1103 = vmatpush1.msra.mxu0 0.0
    %1104 = vmatprep.subr.mxu0 0.0
    %1105 = vmatpush1.msra.mxu0 0.0
    %1106 = vmatprep.subr.mxu0 0.0
    %1107 = vmatpush1.msra.mxu0 0.0
    %1108 = vmatprep.subr.mxu0 0.0
    %1109 = vmatpush1.msra.mxu0 0.0
    %1110 = vmatprep.subr.mxu0 0.0
    %1111 = vmatpush1.msra.mxu0 0.0
    %1112 = vmatprep.subr.mxu0 0.0
    %1113 = vmatpush1.msra.mxu0 0.0
    %1114 = vmatprep.subr.mxu0 0.0
    %1115 = vmatpush1.msra.mxu0 0.0
    %1116 = vmatprep.mubr.f32.mxu0 0.0
    %1117 = vmatmul.mubr.f32.gmra.mrb[0].mxu0 %v1047
    %v1118 = vpop.f32.mrb[0].mxu0
    %v1119 = vadd.f32 0.0, %v1118
    %v1120 = vpop.f32.mrb[0].mxu0
    %1121 = vmatprep.mubr.f32.mxu0 0.0
    %1122 = vmatmul.mubr.f32.gmra.mrb[0].mxu0 %v1050
    %v1123 = vpop.f32.mrb[0].mxu0
    %v1124 = vadd.f32 0.0, %v1123
    %v1125 = vpop.f32.mrb[0].mxu0
    %1126 = vdwg.mxu0
    %1127 = vmatprep.subr.mxu0 0.0
    %1128 = vmatpush1.msra.mxu0 %v949
    %1129 = vmatprep.subr.mxu0 0.0
    %1130 = vmatpush1.msra.mxu0 %v950
    %1131 = vmatprep.subr.mxu0 0.0
    %1132 = vmatpush1.msra.mxu0 0.0
    %1133 = vmatprep.subr.mxu0 0.0
    %1134 = vmatpush1.msra.mxu0 0.0
    %1135 = vmatprep.subr.mxu0 0.0
    %1136 = vmatpush1.msra.mxu0 0.0
    %1137 = vmatprep.subr.mxu0 0.0
    %1138 = vmatpush1.msra.mxu0 0.0
    %1139 = vmatprep.subr.mxu0 0.0
    %1140 = vmatpush1.msra.mxu0 0.0
    %1141 = vmatprep.subr.mxu0 0.0
    %1142 = vmatpush1.msra.mxu0 0.0
    %1143 = vmatprep.subr.mxu0 0.0
    %1144 = vmatpush1.msra.mxu0 0.0
    %1145 = vmatprep.subr.mxu0 0.0
    %1146 = vmatpush1.msra.mxu0 0.0
    %1147 = vmatprep.subr.mxu0 0.0
    %1148 = vmatpush1.msra.mxu0 0.0
    %1149 = vmatprep.subr.mxu0 0.0
    %1150 = vmatpush1.msra.mxu0 0.0
    %1151 = vmatprep.subr.mxu0 0.0
    %1152 = vmatpush1.msra.mxu0 0.0
    %1153 = vmatprep.subr.mxu0 0.0
    %1154 = vmatpush1.msra.mxu0 0.0
    %1155 = vmatprep.subr.mxu0 0.0
    %1156 = vmatpush1.msra.mxu0 0.0
    %1157 = vmatprep.subr.mxu0 0.0
    %1158 = vmatpush1.msra.mxu0 0.0
    %1159 = vmatprep.subr.mxu0 0.0
    %1160 = vmatpush1.msra.mxu0 0.0
    %1161 = vmatprep.subr.mxu0 0.0
    %1162 = vmatpush1.msra.mxu0 0.0
    %1163 = vmatprep.subr.mxu0 0.0
    %1164 = vmatpush1.msra.mxu0 0.0
    %1165 = vmatprep.subr.mxu0 0.0
    %1166 = vmatpush1.msra.mxu0 0.0
    %1167 = vmatprep.subr.mxu0 0.0
    %1168 = vmatpush1.msra.mxu0 0.0
    %1169 = vmatprep.subr.mxu0 0.0
    %1170 = vmatpush1.msra.mxu0 0.0
    %1171 = vmatprep.subr.mxu0 0.0
    %1172 = vmatpush1.msra.mxu0 0.0
    %1173 = vmatprep.subr.mxu0 0.0
    %1174 = vmatpush1.msra.mxu0 0.0
    %1175 = vmatprep.subr.mxu0 0.0
    %1176 = vmatpush1.msra.mxu0 0.0
    %1177 = vmatprep.subr.mxu0 0.0
    %1178 = vmatpush1.msra.mxu0 0.0
    %1179 = vmatprep.subr.mxu0 0.0
    %1180 = vmatpush1.msra.mxu0 0.0
    %1181 = vmatprep.subr.mxu0 0.0
    %1182 = vmatpush1.msra.mxu0 0.0
    %1183 = vmatprep.subr.mxu0 0.0
    %1184 = vmatpush1.msra.mxu0 0.0
    %1185 = vmatprep.subr.mxu0 0.0
    %1186 = vmatpush1.msra.mxu0 0.0
    %1187 = vmatprep.subr.mxu0 0.0
    %1188 = vmatpush1.msra.mxu0 0.0
    %1189 = vmatprep.subr.mxu0 0.0
    %1190 = vmatpush1.msra.mxu0 0.0
    %1191 = vmatprep.mubr.f32.mxu0 0.0
    %1192 = vmatmul.mubr.f32.gmra.mrb[0].mxu0 %v956
    %v1193 = vpop.f32.mrb[0].mxu0
    %v1194 = vadd.f32 %v1119, %v1193
    %v1195 = vpop.f32.mrb[0].mxu0
    %1196 = vmatprep.mubr.f32.mxu0 0.0
    %1197 = vmatmul.mubr.f32.gmra.mrb[0].mxu0 %v959
    %v1198 = vpop.f32.mrb[0].mxu0
    %v1199 = vadd.f32 %v1124, %v1198
    %v1200 = vpop.f32.mrb[0].mxu0
    %1201 = vdwg.mxu0
    %v1202 = vmul.f32 %v1194, %v949
    %v1203 = vmul.f32 %v1199, %v950
    %vm1204 = vcmp.lt.f32.partialorder %v1202, 4.0
    %vm1205 = vcmp.lt.f32.partialorder %v1203, 4.0
    %v1206 = vsel %vm1204, 1, 0
    %v1207 = vsel %vm1205, 1, 0
    %v1208 = vcvt.s32.f32 %v1206
    %v1209 = vcvt.s32.f32 %v1207
    %v1210 = vmul.f32 %v949, %v1208
    %v1211 = vmul.f32 %v950, %v1209
    %v1212 = vmul.f32 %v762, %v1044
    %v1213 = vmul.f32 %v764, %v1045
    %v1214 = vmul.f32 %v765, %v1210
    %v1215 = vmul.f32 %v766, %v1211
    %v1216 = vadd.f32 %v1212, %v1214
    %v1217 = vadd.f32 %v1213, %v1215
    %v1218 = vld [vmem:[%s14] sm:$0xff]
    %v1219 = vld [vmem:[%s14 + $0x8] sm:$0xff]
    %v1220 = vld [vmem:[%s14 + $0x10] sm:$0xff]
    %v1221 = vld [vmem:[%s14 + $0x18] sm:$0xff]
    %v1222 = vld [vmem:[%s14 + $0x20] sm:$0xff]
    %v1223 = vld [vmem:[%s14 + $0x28] sm:$0xff]
    %v1224 = vld [vmem:[%s14 + $0x30] sm:$0xff]
    %v1225 = vld [vmem:[%s14 + $0x38] sm:$0xff]
    %v1226 = vld [vmem:[%s14 + $0x40] sm:$0xff]
    %v1227 = vld [vmem:[%s14 + $0x48] sm:$0xff]
    %v1228 = vld [vmem:[%s14 + $0x50] sm:$0xff]
    %v1229 = vld [vmem:[%s14 + $0x58] sm:$0xff]
    %v1230 = vld [vmem:[%s14 + $0x60] sm:$0xff]
    %v1231 = vld [vmem:[%s14 + $0x68] sm:$0xff]
    %v1232 = vld [vmem:[%s14 + $0x70] sm:$0xff]
    %v1233 = vld [vmem:[%s14 + $0x78] sm:$0xff]
    %v1235 = vsel %vm683, %v1216, 0
    %v1238 = vsel %vm683, %v1217, 0
    %1240 = vmatprep.subr.mxu0 %v1219
    %1241 = vmatpush1.msra.mxu0 %v1218
    %1242 = vmatprep.subr.mxu0 %v1227
    %1243 = vmatpush1.msra.mxu0 %v1226
    %1244 = vmatprep.subr.mxu0 0.0
    %1245 = vmatpush1.msra.mxu0 0.0
    %1246 = vmatprep.subr.mxu0 0.0
    %1247 = vmatpush1.msra.mxu0 0.0
    %1248 = vmatprep.subr.mxu0 0.0
    %1249 = vmatpush1.msra.mxu0 0.0
    %1250 = vmatprep.subr.mxu0 0.0
    %1251 = vmatpush1.msra.mxu0 0.0
    %1252 = vmatprep.subr.mxu0 0.0
    %1253 = vmatpush1.msra.mxu0 0.0
    %1254 = vmatprep.subr.mxu0 0.0
    %1255 = vmatpush1.msra.mxu0 0.0
    %1256 = vmatprep.subr.mxu0 0.0
    %1257 = vmatpush1.msra.mxu0 0.0
    %1258 = vmatprep.subr.mxu0 0.0
    %1259 = vmatpush1.msra.mxu0 0.0
    %1260 = vmatprep.subr.mxu0 0.0
    %1261 = vmatpush1.msra.mxu0 0.0
    %1262 = vmatprep.subr.mxu0 0.0
    %1263 = vmatpush1.msra.mxu0 0.0
    %1264 = vmatprep.subr.mxu0 0.0
    %1265 = vmatpush1.msra.mxu0 0.0
    %1266 = vmatprep.subr.mxu0 0.0
    %1267 = vmatpush1.msra.mxu0 0.0
    %1268 = vmatprep.subr.mxu0 0.0
    %1269 = vmatpush1.msra.mxu0 0.0
    %1270 = vmatprep.subr.mxu0 0.0
    %1271 = vmatpush1.msra.mxu0 0.0
    %1272 = vmatprep.subr.mxu0 0.0
    %1273 = vmatpush1.msra.mxu0 0.0
    %1274 = vmatprep.subr.mxu0 0.0
    %1275 = vmatpush1.msra.mxu0 0.0
    %1276 = vmatprep.subr.mxu0 0.0
    %1277 = vmatpush1.msra.mxu0 0.0
    %1278 = vmatprep.subr.mxu0 0.0
    %1279 = vmatpush1.msra.mxu0 0.0
    %1280 = vmatprep.subr.mxu0 0.0
    %1281 = vmatpush1.msra.mxu0 0.0
    %1282 = vmatprep.subr.mxu0 0.0
    %1283 = vmatpush1.msra.mxu0 0.0
    %1284 = vmatprep.subr.mxu0 0.0
    %1285 = vmatpush1.msra.mxu0 0.0
    %1286 = vmatprep.subr.mxu0 0.0
    %1287 = vmatpush1.msra.mxu0 0.0
    %1288 = vmatprep.subr.mxu0 0.0
    %1289 = vmatpush1.msra.mxu0 0.0
    %1290 = vmatprep.subr.mxu0 0.0
    %1291 = vmatpush1.msra.mxu0 0.0
    %1292 = vmatprep.subr.mxu0 0.0
    %1293 = vmatpush1.msra.mxu0 0.0
    %1294 = vmatprep.subr.mxu0 0.0
    %1295 = vmatpush1.msra.mxu0 0.0
    %1296 = vmatprep.subr.mxu0 0.0
    %1297 = vmatpush1.msra.mxu0 0.0
    %1298 = vmatprep.subr.mxu0 0.0
    %1299 = vmatpush1.msra.mxu0 0.0
    %1300 = vmatprep.subr.mxu0 0.0
    %1301 = vmatpush1.msra.mxu0 0.0
    %1302 = vmatprep.subr.mxu0 0.0
    %1303 = vmatpush1.msra.mxu0 0.0
    %1304 = vmatprep.mubr.f32.mxu0 0.0
    %1305 = vmatmul.mubr.f32.gmra.mrb[0].mxu0 %v1235
    %v1306 = vpop.f32.mrb[0].mxu0
    %v1307 = vadd.f32 0.0, %v1306
    %v1308 = vpop.f32.mrb[0].mxu0
    %v1309 = vadd.f32 0.0, %v1308
    %1310 = vmatprep.mubr.f32.mxu0 0.0
    %1311 = vmatmul.mubr.f32.gmra.mrb[0].mxu0 %v1238
    %v1312 = vpop.f32.mrb[0].mxu0
    %v1313 = vadd.f32 0.0, %v1312
    %v1314 = vpop.f32.mrb[0].mxu0
    %v1315 = vadd.f32 0.0, %v1314
    %1316 = vdwg.mxu0
    %1317 = vmatprep.subr.mxu0 %v1221
    %1318 = vmatpush1.msra.mxu0 %v1220
    %1319 = vmatprep.subr.mxu0 %v1229
    %1320 = vmatpush1.msra.mxu0 %v1228
    %1321 = vmatprep.subr.mxu0 0.0
    %1322 = vmatpush1.msra.mxu0 0.0
    %1323 = vmatprep.subr.mxu0 0.0
    %1324 = vmatpush1.msra.mxu0 0.0
    %1325 = vmatprep.subr.mxu0 0.0
    %1326 = vmatpush1.msra.mxu0 0.0
    %1327 = vmatprep.subr.mxu0 0.0
    %1328 = vmatpush1.msra.mxu0 0.0
    %1329 = vmatprep.subr.mxu0 0.0
    %1330 = vmatpush1.msra.mxu0 0.0
    %1331 = vmatprep.subr.mxu0 0.0
    %1332 = vmatpush1.msra.mxu0 0.0
    %1333 = vmatprep.subr.mxu0 0.0
    %1334 = vmatpush1.msra.mxu0 0.0
    %1335 = vmatprep.subr.mxu0 0.0
    %1336 = vmatpush1.msra.mxu0 0.0
    %1337 = vmatprep.subr.mxu0 0.0
    %1338 = vmatpush1.msra.mxu0 0.0
    %1339 = vmatprep.subr.mxu0 0.0
    %1340 = vmatpush1.msra.mxu0 0.0
    %1341 = vmatprep.subr.mxu0 0.0
    %1342 = vmatpush1.msra.mxu0 0.0
    %1343 = vmatprep.subr.mxu0 0.0
    %1344 = vmatpush1.msra.mxu0 0.0
    %1345 = vmatprep.subr.mxu0 0.0
    %1346 = vmatpush1.msra.mxu0 0.0
    %1347 = vmatprep.subr.mxu0 0.0
    %1348 = vmatpush1.msra.mxu0 0.0
    %1349 = vmatprep.subr.mxu0 0.0
    %1350 = vmatpush1.msra.mxu0 0.0
    %1351 = vmatprep.subr.mxu0 0.0
    %1352 = vmatpush1.msra.mxu0 0.0
    %1353 = vmatprep.subr.mxu0 0.0
    %1354 = vmatpush1.msra.mxu0 0.0
    %1355 = vmatprep.subr.mxu0 0.0
    %1356 = vmatpush1.msra.mxu0 0.0
    %1357 = vmatprep.subr.mxu0 0.0
    %1358 = vmatpush1.msra.mxu0 0.0
    %1359 = vmatprep.subr.mxu0 0.0
    %1360 = vmatpush1.msra.mxu0 0.0
    %1361 = vmatprep.subr.mxu0 0.0
    %1362 = vmatpush1.msra.mxu0 0.0
    %1363 = vmatprep.subr.mxu0 0.0
    %1364 = vmatpush1.msra.mxu0 0.0
    %1365 = vmatprep.subr.mxu0 0.0
    %1366 = vmatpush1.msra.mxu0 0.0
    %1367 = vmatprep.subr.mxu0 0.0
    %1368 = vmatpush1.msra.mxu0 0.0
    %1369 = vmatprep.subr.mxu0 0.0
    %1370 = vmatpush1.msra.mxu0 0.0
    %1371 = vmatprep.subr.mxu0 0.0
    %1372 = vmatpush1.msra.mxu0 0.0
    %1373 = vmatprep.subr.mxu0 0.0
    %1374 = vmatpush1.msra.mxu0 0.0
    %1375 = vmatprep.subr.mxu0 0.0
    %1376 = vmatpush1.msra.mxu0 0.0
    %1377 = vmatprep.subr.mxu0 0.0
    %1378 = vmatpush1.msra.mxu0 0.0
    %1379 = vmatprep.subr.mxu0 0.0
    %1380 = vmatpush1.msra.mxu0 0.0
    %1381 = vmatprep.mubr.f32.mxu0 0.0
    %1382 = vmatmul.mubr.f32.gmra.mrb[0].mxu0 %v1235
    %v1383 = vpop.f32.mrb[0].mxu0
    %v1384 = vadd.f32 0.0, %v1383
    %v1385 = vpop.f32.mrb[0].mxu0
    %v1386 = vadd.f32 0.0, %v1385
    %1387 = vmatprep.mubr.f32.mxu0 0.0
    %1388 = vmatmul.mubr.f32.gmra.mrb[0].mxu0 %v1238
    %v1389 = vpop.f32.mrb[0].mxu0
    %v1390 = vadd.f32 0.0, %v1389
    %v1391 = vpop.f32.mrb[0].mxu0
    %v1392 = vadd.f32 0.0, %v1391
    %1393 = vdwg.mxu0
    %1394 = vmatprep.subr.mxu0 %v1223
    %1395 = vmatpush1.msra.mxu0 %v1222
    %1396 = vmatprep.subr.mxu0 %v1231
    %1397 = vmatpush1.msra.mxu0 %v1230
    %1398 = vmatprep.subr.mxu0 0.0
    %1399 = vmatpush1.msra.mxu0 0.0
    %1400 = vmatprep.subr.mxu0 0.0
    %1401 = vmatpush1.msra.mxu0 0.0
    %1402 = vmatprep.subr.mxu0 0.0
    %1403 = vmatpush1.msra.mxu0 0.0
    %1404 = vmatprep.subr.mxu0 0.0
    %1405 = vmatpush1.msra.mxu0 0.0
    %1406 = vmatprep.subr.mxu0 0.0
    %1407 = vmatpush1.msra.mxu0 0.0
    %1408 = vmatprep.subr.mxu0 0.0
    %1409 = vmatpush1.msra.mxu0 0.0
    %1410 = vmatprep.subr.mxu0 0.0
    %1411 = vmatpush1.msra.mxu0 0.0
    %1412 = vmatprep.subr.mxu0 0.0
    %1413 = vmatpush1.msra.mxu0 0.0
    %1414 = vmatprep.subr.mxu0 0.0
    %1415 = vmatpush1.msra.mxu0 0.0
    %1416 = vmatprep.subr.mxu0 0.0
    %1417 = vmatpush1.msra.mxu0 0.0
    %1418 = vmatprep.subr.mxu0 0.0
    %1419 = vmatpush1.msra.mxu0 0.0
    %1420 = vmatprep.subr.mxu0 0.0
    %1421 = vmatpush1.msra.mxu0 0.0
    %1422 = vmatprep.subr.mxu0 0.0
    %1423 = vmatpush1.msra.mxu0 0.0
    %1424 = vmatprep.subr.mxu0 0.0
    %1425 = vmatpush1.msra.mxu0 0.0
    %1426 = vmatprep.subr.mxu0 0.0
    %1427 = vmatpush1.msra.mxu0 0.0
    %1428 = vmatprep.subr.mxu0 0.0
    %1429 = vmatpush1.msra.mxu0 0.0
    %1430 = vmatprep.subr.mxu0 0.0
    %1431 = vmatpush1.msra.mxu0 0.0
    %1432 = vmatprep.subr.mxu0 0.0
    %1433 = vmatpush1.msra.mxu0 0.0
    %1434 = vmatprep.subr.mxu0 0.0
    %1435 = vmatpush1.msra.mxu0 0.0
    %1436 = vmatprep.subr.mxu0 0.0
    %1437 = vmatpush1.msra.mxu0 0.0
    %1438 = vmatprep.subr.mxu0 0.0
    %1439 = vmatpush1.msra.mxu0 0.0
    %1440 = vmatprep.subr.mxu0 0.0
    %1441 = vmatpush1.msra.mxu0 0.0
    %1442 = vmatprep.subr.mxu0 0.0
    %1443 = vmatpush1.msra.mxu0 0.0
    %1444 = vmatprep.subr.mxu0 0.0
    %1445 = vmatpush1.msra.mxu0 0.0
    %1446 = vmatprep.subr.mxu0 0.0
    %1447 = vmatpush1.msra.mxu0 0.0
    %1448 = vmatprep.subr.mxu0 0.0
    %1449 = vmatpush1.msra.mxu0 0.0
    %1450 = vmatprep.subr.mxu0 0.0
    %1451 = vmatpush1.msra.mxu0 0.0
    %1452 = vmatprep.subr.mxu0 0.0
    %1453 = vmatpush1.msra.mxu0 0.0
    %1454 = vmatprep.subr.mxu0 0.0
    %1455 = vmatpush1.msra.mxu0 0.0
    %1456 = vmatprep.subr.mxu0 0.0
    %1457 = vmatpush1.msra.mxu0 0.0
    %1458 = vmatprep.mubr.f32.mxu0 0.0
    %1459 = vmatmul.mubr.f32.gmra.mrb[0].mxu0 %v1235
    %v1460 = vpop.f32.mrb[0].mxu0
    %v1461 = vadd.f32 0.0, %v1460
    %v1462 = vpop.f32.mrb[0].mxu0
    %v1463 = vadd.f32 0.0, %v1462
    %1464 = vmatprep.mubr.f32.mxu0 0.0
    %1465 = vmatmul.mubr.f32.gmra.mrb[0].mxu0 %v1238
    %v1466 = vpop.f32.mrb[0].mxu0
    %v1467 = vadd.f32 0.0, %v1466
    %v1468 = vpop.f32.mrb[0].mxu0
    %v1469 = vadd.f32 0.0, %v1468
    %1470 = vdwg.mxu0
    %1471 = vmatprep.subr.mxu0 %v1225
    %1472 = vmatpush1.msra.mxu0 %v1224
    %1473 = vmatprep.subr.mxu0 %v1233
    %1474 = vmatpush1.msra.mxu0 %v1232
    %1475 = vmatprep.subr.mxu0 0.0
    %1476 = vmatpush1.msra.mxu0 0.0
    %1477 = vmatprep.subr.mxu0 0.0
    %1478 = vmatpush1.msra.mxu0 0.0
    %1479 = vmatprep.subr.mxu0 0.0
    %1480 = vmatpush1.msra.mxu0 0.0
    %1481 = vmatprep.subr.mxu0 0.0
    %1482 = vmatpush1.msra.mxu0 0.0
    %1483 = vmatprep.subr.mxu0 0.0
    %1484 = vmatpush1.msra.mxu0 0.0
    %1485 = vmatprep.subr.mxu0 0.0
    %1486 = vmatpush1.msra.mxu0 0.0
    %1487 = vmatprep.subr.mxu0 0.0
    %1488 = vmatpush1.msra.mxu0 0.0
    %1489 = vmatprep.subr.mxu0 0.0
    %1490 = vmatpush1.msra.mxu0 0.0
    %1491 = vmatprep.subr.mxu0 0.0
    %1492 = vmatpush1.msra.mxu0 0.0
    %1493 = vmatprep.subr.mxu0 0.0
    %1494 = vmatpush1.msra.mxu0 0.0
    %1495 = vmatprep.subr.mxu0 0.0
    %1496 = vmatpush1.msra.mxu0 0.0
    %1497 = vmatprep.subr.mxu0 0.0
    %1498 = vmatpush1.msra.mxu0 0.0
    %1499 = vmatprep.subr.mxu0 0.0
    %1500 = vmatpush1.msra.mxu0 0.0
    %1501 = vmatprep.subr.mxu0 0.0
    %1502 = vmatpush1.msra.mxu0 0.0
    %1503 = vmatprep.subr.mxu0 0.0
    %1504 = vmatpush1.msra.mxu0 0.0
    %1505 = vmatprep.subr.mxu0 0.0
    %1506 = vmatpush1.msra.mxu0 0.0
    %1507 = vmatprep.subr.mxu0 0.0
    %1508 = vmatpush1.msra.mxu0 0.0
    %1509 = vmatprep.subr.mxu0 0.0
    %1510 = vmatpush1.msra.mxu0 0.0
    %1511 = vmatprep.subr.mxu0 0.0
    %1512 = vmatpush1.msra.mxu0 0.0
    %1513 = vmatprep.subr.mxu0 0.0
    %1514 = vmatpush1.msra.mxu0 0.0
    %1515 = vmatprep.subr.mxu0 0.0
    %1516 = vmatpush1.msra.mxu0 0.0
    %1517 = vmatprep.subr.mxu0 0.0
    %1518 = vmatpush1.msra.mxu0 0.0
    %1519 = vmatprep.subr.mxu0 0.0
    %1520 = vmatpush1.msra.mxu0 0.0
    %1521 = vmatprep.subr.mxu0 0.0
    %1522 = vmatpush1.msra.mxu0 0.0
    %1523 = vmatprep.subr.mxu0 0.0
    %1524 = vmatpush1.msra.mxu0 0.0
    %1525 = vmatprep.subr.mxu0 0.0
    %1526 = vmatpush1.msra.mxu0 0.0
    %1527 = vmatprep.subr.mxu0 0.0
    %1528 = vmatpush1.msra.mxu0 0.0
    %1529 = vmatprep.subr.mxu0 0.0
    %1530 = vmatpush1.msra.mxu0 0.0
    %1531 = vmatprep.subr.mxu0 0.0
    %1532 = vmatpush1.msra.mxu0 0.0
    %1533 = vmatprep.subr.mxu0 0.0
    %1534 = vmatpush1.msra.mxu0 0.0
    %1535 = vmatprep.mubr.f32.mxu0 0.0
    %1536 = vmatmul.mubr.f32.gmra.mrb[0].mxu0 %v1235
    %v1537 = vpop.f32.mrb[0].mxu0
    %v1538 = vadd.f32 0.0, %v1537
    %v1539 = vpop.f32.mrb[0].mxu0
    %v1540 = vadd.f32 0.0, %v1539
    %1541 = vmatprep.mubr.f32.mxu0 0.0
    %1542 = vmatmul.mubr.f32.gmra.mrb[0].mxu0 %v1238
    %v1543 = vpop.f32.mrb[0].mxu0
    %v1544 = vadd.f32 0.0, %v1543
    %v1545 = vpop.f32.mrb[0].mxu0
    %v1546 = vadd.f32 0.0, %v1545
    %1547 = vdwg.mxu0
    %v1548 = vpack.c.bf16 %v597, %v596
    %v1549 = vld [vmem:[%s7] sm:$0xff]
    %v1550 = vld [vmem:[%s7 + $0x8] sm:$0xff]
    %v1551 = vld [vmem:[%s7 + $0x10] sm:$0xff]
    %v1552 = vld [vmem:[%s7 + $0x18] sm:$0xff]
    %v1553 = vld [vmem:[%s7 + $0x20] sm:$0xff]
    %v1554 = vld [vmem:[%s7 + $0x28] sm:$0xff]
    %v1555 = vld [vmem:[%s7 + $0x30] sm:$0xff]
    %v1556 = vld [vmem:[%s7 + $0x38] sm:$0xff]
    %v1557 = vld [vmem:[%s7 + $0x40] sm:$0xff]
    %v1558 = vld [vmem:[%s7 + $0x48] sm:$0xff]
    %v1559 = vld [vmem:[%s7 + $0x50] sm:$0xff]
    %v1560 = vld [vmem:[%s7 + $0x58] sm:$0xff]
    %v1561 = vld [vmem:[%s7 + $0x60] sm:$0xff]
    %v1562 = vld [vmem:[%s7 + $0x68] sm:$0xff]
    %v1563 = vld [vmem:[%s7 + $0x70] sm:$0xff]
    %v1564 = vld [vmem:[%s7 + $0x78] sm:$0xff]
    %v1581 = vunpack.c.l.b16 %v1549
    %v1582 = vunpack.c.h.b16 %v1549
    %v1583 = vunpack.c.l.b16 %v1550
    %v1584 = vunpack.c.h.b16 %v1550
    %v1585 = vunpack.c.l.b16 %v1551
    %v1586 = vunpack.c.h.b16 %v1551
    %v1587 = vunpack.c.l.b16 %v1552
    %v1588 = vunpack.c.h.b16 %v1552
    %v1589 = vunpack.c.l.b16 %v1553
    %v1590 = vunpack.c.h.b16 %v1553
    %v1591 = vunpack.c.l.b16 %v1554
    %v1592 = vunpack.c.h.b16 %v1554
    %v1593 = vunpack.c.l.b16 %v1555
    %v1594 = vunpack.c.h.b16 %v1555
    %v1595 = vunpack.c.l.b16 %v1556
    %v1596 = vunpack.c.h.b16 %v1556
    %v1597 = vunpack.c.l.b16 %v1557
    %v1598 = vunpack.c.h.b16 %v1557
    %v1599 = vunpack.c.l.b16 %v1558
    %v1600 = vunpack.c.h.b16 %v1558
    %v1601 = vunpack.c.l.b16 %v1559
    %v1602 = vunpack.c.h.b16 %v1559
    %v1603 = vunpack.c.l.b16 %v1560
    %v1604 = vunpack.c.h.b16 %v1560
    %v1605 = vunpack.c.l.b16 %v1561
    %v1606 = vunpack.c.h.b16 %v1561
    %v1607 = vunpack.c.l.b16 %v1562
    %v1608 = vunpack.c.h.b16 %v1562
    %v1609 = vunpack.c.l.b16 %v1563
    %v1610 = vunpack.c.h.b16 %v1563
    %v1611 = vunpack.c.l.b16 %v1564
    %v1612 = vunpack.c.h.b16 %v1564
    %v1613 = vpack.c.b16 %v1589, %v1581
    %v1614 = vpack.c.b16 %v1590, %v1582
    %v1615 = vpack.c.b16 %v1591, %v1583
    %v1616 = vpack.c.b16 %v1592, %v1584
    %v1617 = vpack.c.b16 %v1593, %v1585
    %v1618 = vpack.c.b16 %v1594, %v1586
    %v1619 = vpack.c.b16 %v1595, %v1587
    %v1620 = vpack.c.b16 %v1596, %v1588
    %v1621 = vpack.c.b16 %v1605, %v1597
    %v1622 = vpack.c.b16 %v1606, %v1598
    %v1623 = vpack.c.b16 %v1607, %v1599
    %v1624 = vpack.c.b16 %v1608, %v1600
    %v1625 = vpack.c.b16 %v1609, %v1601
    %v1626 = vpack.c.b16 %v1610, %v1602
    %v1627 = vpack.c.b16 %v1611, %v1603
    %v1628 = vpack.c.b16 %v1612, %v1604
    %v1646 = vsel %vm60, %v1548, 0
    %1648 = vmatprep.subr.bf16.mxu0 %v1614
    %1649 = vmatpush1.bf16.msra.mxu0 %v1613
    %1650 = vmatprep.subr.bf16.mxu0 %v1622
    %1651 = vmatpush1.bf16.msra.mxu0 %v1621
    %1652 = vmatprep.subr.bf16.mxu0 0
    %1653 = vmatpush1.bf16.msra.mxu0 0
    %1654 = vmatprep.subr.bf16.mxu0 0
    %1655 = vmatpush1.bf16.msra.mxu0 0
    %1656 = vmatprep.subr.bf16.mxu0 0
    %1657 = vmatpush1.bf16.msra.mxu0 0
    %1658 = vmatprep.subr.bf16.mxu0 0
    %1659 = vmatpush1.bf16.msra.mxu0 0
    %1660 = vmatprep.subr.bf16.mxu0 0
    %1661 = vmatpush1.bf16.msra.mxu0 0
    %1662 = vmatprep.subr.bf16.mxu0 0
    %1663 = vmatpush1.bf16.msra.mxu0 0
    %1664 = vmatprep.subr.bf16.mxu0 0
    %1665 = vmatpush1.bf16.msra.mxu0 0
    %1666 = vmatprep.subr.bf16.mxu0 0
    %1667 = vmatpush1.bf16.msra.mxu0 0
    %1668 = vmatprep.subr.bf16.mxu0 0
    %1669 = vmatpush1.bf16.msra.mxu0 0
    %1670 = vmatprep.subr.bf16.mxu0 0
    %1671 = vmatpush1.bf16.msra.mxu0 0
    %1672 = vmatprep.subr.bf16.mxu0 0
    %1673 = vmatpush1.bf16.msra.mxu0 0
    %1674 = vmatprep.subr.bf16.mxu0 0
    %1675 = vmatpush1.bf16.msra.mxu0 0
    %1676 = vmatprep.subr.bf16.mxu0 0
    %1677 = vmatpush1.bf16.msra.mxu0 0
    %1678 = vmatprep.subr.bf16.mxu0 0
    %1679 = vmatpush1.bf16.msra.mxu0 0
    %1680 = vmatprep.mubr.bf16.mxu0 0
    %1681 = vmatmul.mubr.bf16.gmra.mrb[0].mxu0 %v1646
    %v1682 = vpop.f32.mrb[0].mxu0
    %v1683 = vadd.f32 0.0, %v1682
    %v1684 = vpop.f32.mrb[0].mxu0
    %v1685 = vadd.f32 0.0, %v1684
    %v1686 = vpop.f32.mrb[0].mxu0
    %v1687 = vadd.f32 0.0, %v1686
    %v1688 = vpop.f32.mrb[0].mxu0
    %v1689 = vadd.f32 0.0, %v1688
    %1690 = vdwg.mxu0
    %1691 = vmatprep.subr.bf16.mxu0 %v1616
    %1692 = vmatpush1.bf16.msra.mxu0 %v1615
    %1693 = vmatprep.subr.bf16.mxu0 %v1624
    %1694 = vmatpush1.bf16.msra.mxu0 %v1623
    %1695 = vmatprep.subr.bf16.mxu0 0
    %1696 = vmatpush1.bf16.msra.mxu0 0
    %1697 = vmatprep.subr.bf16.mxu0 0
    %1698 = vmatpush1.bf16.msra.mxu0 0
    %1699 = vmatprep.subr.bf16.mxu0 0
    %1700 = vmatpush1.bf16.msra.mxu0 0
    %1701 = vmatprep.subr.bf16.mxu0 0
    %1702 = vmatpush1.bf16.msra.mxu0 0
    %1703 = vmatprep.subr.bf16.mxu0 0
    %1704 = vmatpush1.bf16.msra.mxu0 0
    %1705 = vmatprep.subr.bf16.mxu0 0
    %1706 = vmatpush1.bf16.msra.mxu0 0
    %1707 = vmatprep.subr.bf16.mxu0 0
    %1708 = vmatpush1.bf16.msra.mxu0 0
    %1709 = vmatprep.subr.bf16.mxu0 0
    %1710 = vmatpush1.bf16.msra.mxu0 0
    %1711 = vmatprep.subr.bf16.mxu0 0
    %1712 = vmatpush1.bf16.msra.mxu0 0
    %1713 = vmatprep.subr.bf16.mxu0 0
    %1714 = vmatpush1.bf16.msra.mxu0 0
    %1715 = vmatprep.subr.bf16.mxu0 0
    %1716 = vmatpush1.bf16.msra.mxu0 0
    %1717 = vmatprep.subr.bf16.mxu0 0
    %1718 = vmatpush1.bf16.msra.mxu0 0
    %1719 = vmatprep.subr.bf16.mxu0 0
    %1720 = vmatpush1.bf16.msra.mxu0 0
    %1721 = vmatprep.subr.bf16.mxu0 0
    %1722 = vmatpush1.bf16.msra.mxu0 0
    %1723 = vmatprep.mubr.bf16.mxu0 0
    %1724 = vmatmul.mubr.bf16.gmra.mrb[0].mxu0 %v1646
    %v1725 = vpop.f32.mrb[0].mxu0
    %v1726 = vadd.f32 0.0, %v1725
    %v1727 = vpop.f32.mrb[0].mxu0
    %v1728 = vadd.f32 0.0, %v1727
    %v1729 = vpop.f32.mrb[0].mxu0
    %v1730 = vadd.f32 0.0, %v1729
    %v1731 = vpop.f32.mrb[0].mxu0
    %v1732 = vadd.f32 0.0, %v1731
    %1733 = vdwg.mxu0
    %1734 = vmatprep.subr.bf16.mxu0 %v1618
    %1735 = vmatpush1.bf16.msra.mxu0 %v1617
    %1736 = vmatprep.subr.bf16.mxu0 %v1626
    %1737 = vmatpush1.bf16.msra.mxu0 %v1625
    %1738 = vmatprep.subr.bf16.mxu0 0
    %1739 = vmatpush1.bf16.msra.mxu0 0
    %1740 = vmatprep.subr.bf16.mxu0 0
    %1741 = vmatpush1.bf16.msra.mxu0 0
    %1742 = vmatprep.subr.bf16.mxu0 0
    %1743 = vmatpush1.bf16.msra.mxu0 0
    %1744 = vmatprep.subr.bf16.mxu0 0
    %1745 = vmatpush1.bf16.msra.mxu0 0
    %1746 = vmatprep.subr.bf16.mxu0 0
    %1747 = vmatpush1.bf16.msra.mxu0 0
    %1748 = vmatprep.subr.bf16.mxu0 0
    %1749 = vmatpush1.bf16.msra.mxu0 0
    %1750 = vmatprep.subr.bf16.mxu0 0
    %1751 = vmatpush1.bf16.msra.mxu0 0
    %1752 = vmatprep.subr.bf16.mxu0 0
    %1753 = vmatpush1.bf16.msra.mxu0 0
    %1754 = vmatprep.subr.bf16.mxu0 0
    %1755 = vmatpush1.bf16.msra.mxu0 0
    %1756 = vmatprep.subr.bf16.mxu0 0
    %1757 = vmatpush1.bf16.msra.mxu0 0
    %1758 = vmatprep.subr.bf16.mxu0 0
    %1759 = vmatpush1.bf16.msra.mxu0 0
    %1760 = vmatprep.subr.bf16.mxu0 0
    %1761 = vmatpush1.bf16.msra.mxu0 0
    %1762 = vmatprep.subr.bf16.mxu0 0
    %1763 = vmatpush1.bf16.msra.mxu0 0
    %1764 = vmatprep.subr.bf16.mxu0 0
    %1765 = vmatpush1.bf16.msra.mxu0 0
    %1766 = vmatprep.mubr.bf16.mxu0 0
    %1767 = vmatmul.mubr.bf16.gmra.mrb[0].mxu0 %v1646
    %v1768 = vpop.f32.mrb[0].mxu0
    %v1769 = vadd.f32 0.0, %v1768
    %v1770 = vpop.f32.mrb[0].mxu0
    %v1771 = vadd.f32 0.0, %v1770
    %v1772 = vpop.f32.mrb[0].mxu0
    %v1773 = vadd.f32 0.0, %v1772
    %v1774 = vpop.f32.mrb[0].mxu0
    %v1775 = vadd.f32 0.0, %v1774
    %1776 = vdwg.mxu0
    %1777 = vmatprep.subr.bf16.mxu0 %v1620
    %1778 = vmatpush1.bf16.msra.mxu0 %v1619
    %1779 = vmatprep.subr.bf16.mxu0 %v1628
    %1780 = vmatpush1.bf16.msra.mxu0 %v1627
    %1781 = vmatprep.subr.bf16.mxu0 0
    %1782 = vmatpush1.bf16.msra.mxu0 0
    %1783 = vmatprep.subr.bf16.mxu0 0
    %1784 = vmatpush1.bf16.msra.mxu0 0
    %1785 = vmatprep.subr.bf16.mxu0 0
    %1786 = vmatpush1.bf16.msra.mxu0 0
    %1787 = vmatprep.subr.bf16.mxu0 0
    %1788 = vmatpush1.bf16.msra.mxu0 0
    %1789 = vmatprep.subr.bf16.mxu0 0
    %1790 = vmatpush1.bf16.msra.mxu0 0
    %1791 = vmatprep.subr.bf16.mxu0 0
    %1792 = vmatpush1.bf16.msra.mxu0 0
    %1793 = vmatprep.subr.bf16.mxu0 0
    %1794 = vmatpush1.bf16.msra.mxu0 0
    %1795 = vmatprep.subr.bf16.mxu0 0
    %1796 = vmatpush1.bf16.msra.mxu0 0
    %1797 = vmatprep.subr.bf16.mxu0 0
    %1798 = vmatpush1.bf16.msra.mxu0 0
    %1799 = vmatprep.subr.bf16.mxu0 0
    %1800 = vmatpush1.bf16.msra.mxu0 0
    %1801 = vmatprep.subr.bf16.mxu0 0
    %1802 = vmatpush1.bf16.msra.mxu0 0
    %1803 = vmatprep.subr.bf16.mxu0 0
    %1804 = vmatpush1.bf16.msra.mxu0 0
    %1805 = vmatprep.subr.bf16.mxu0 0
    %1806 = vmatpush1.bf16.msra.mxu0 0
    %1807 = vmatprep.subr.bf16.mxu0 0
    %1808 = vmatpush1.bf16.msra.mxu0 0
    %1809 = vmatprep.mubr.bf16.mxu0 0
    %1810 = vmatmul.mubr.bf16.gmra.mrb[0].mxu0 %v1646
    %v1811 = vpop.f32.mrb[0].mxu0
    %v1812 = vadd.f32 0.0, %v1811
    %v1813 = vpop.f32.mrb[0].mxu0
    %v1814 = vadd.f32 0.0, %v1813
    %v1815 = vpop.f32.mrb[0].mxu0
    %v1816 = vadd.f32 0.0, %v1815
    %v1817 = vpop.f32.mrb[0].mxu0
    %v1818 = vadd.f32 0.0, %v1817
    %1819 = vdwg.mxu0
    %v1820 = vmax.f32 %v1683, 0.0
    %v1821 = vmax.f32 %v1685, 0.0
    %v1822 = vmax.f32 %v1726, 0.0
    %v1823 = vmax.f32 %v1728, 0.0
    %v1824 = vmax.f32 %v1769, 0.0
    %v1825 = vmax.f32 %v1771, 0.0
    %v1826 = vmax.f32 %v1812, 0.0
    %v1827 = vmax.f32 %v1814, 0.0
    %v1828 = vmax.f32 %v1687, 0.0
    %v1829 = vmax.f32 %v1689, 0.0
    %v1830 = vmax.f32 %v1730, 0.0
    %v1831 = vmax.f32 %v1732, 0.0
    %v1832 = vmax.f32 %v1773, 0.0
    %v1833 = vmax.f32 %v1775, 0.0
    %v1834 = vmax.f32 %v1816, 0.0
    %v1835 = vmax.f32 %v1818, 0.0
    %v1836 = vmul.f32 %v1820, %v1307
    %v1837 = vmul.f32 %v1821, %v1309
    %v1838 = vmul.f32 %v1822, %v1384
    %v1839 = vmul.f32 %v1823, %v1386
    %v1840 = vmul.f32 %v1824, %v1461
    %v1841 = vmul.f32 %v1825, %v1463
    %v1842 = vmul.f32 %v1826, %v1538
    %v1843 = vmul.f32 %v1827, %v1540
    %v1844 = vmul.f32 %v1828, %v1313
    %v1845 = vmul.f32 %v1829, %v1315
    %v1846 = vmul.f32 %v1830, %v1390
    %v1847 = vmul.f32 %v1831, %v1392
    %v1848 = vmul.f32 %v1832, %v1467
    %v1849 = vmul.f32 %v1833, %v1469
    %v1850 = vmul.f32 %v1834, %v1544
    %v1851 = vmul.f32 %v1835, %v1546
    %v1852 = vpack.c.bf16 %v1844, %v1836
    %v1853 = vpack.c.bf16 %v1845, %v1837
    %v1854 = vpack.c.bf16 %v1846, %v1838
    %v1855 = vpack.c.bf16 %v1847, %v1839
    %v1856 = vpack.c.bf16 %v1848, %v1840
    %v1857 = vpack.c.bf16 %v1849, %v1841
    %v1858 = vpack.c.bf16 %v1850, %v1842
    %v1859 = vpack.c.bf16 %v1851, %v1843
    %v1860 = vld [vmem:[%s8] sm:$0xf]
    %v1861 = vld [vmem:[%s8 + $0x4] sm:$0xf]
    %v1862 = vld [vmem:[%s8 + $0x8] sm:$0xf]
    %v1863 = vld [vmem:[%s8 + $0xc] sm:$0xf]
    %v1864 = vld [vmem:[%s8 + $0x10] sm:$0xf]
    %v1865 = vld [vmem:[%s8 + $0x14] sm:$0xf]
    %v1866 = vld [vmem:[%s8 + $0x18] sm:$0xf]
    %v1867 = vld [vmem:[%s8 + $0x1c] sm:$0xf]
    %v1868 = vld [vmem:[%s8 + $0x20] sm:$0xf]
    %v1869 = vld [vmem:[%s8 + $0x24] sm:$0xf]
    %v1870 = vld [vmem:[%s8 + $0x28] sm:$0xf]
    %v1871 = vld [vmem:[%s8 + $0x2c] sm:$0xf]
    %v1872 = vld [vmem:[%s8 + $0x30] sm:$0xf]
    %v1873 = vld [vmem:[%s8 + $0x34] sm:$0xf]
    %v1874 = vld [vmem:[%s8 + $0x38] sm:$0xf]
    %v1875 = vld [vmem:[%s8 + $0x3c] sm:$0xf]
    %v1876 = vld [vmem:[%s8 + $0x40] sm:$0xf]
    %v1877 = vld [vmem:[%s8 + $0x44] sm:$0xf]
    %v1878 = vld [vmem:[%s8 + $0x48] sm:$0xf]
    %v1879 = vld [vmem:[%s8 + $0x4c] sm:$0xf]
    %v1880 = vld [vmem:[%s8 + $0x50] sm:$0xf]
    %v1881 = vld [vmem:[%s8 + $0x54] sm:$0xf]
    %v1882 = vld [vmem:[%s8 + $0x58] sm:$0xf]
    %v1883 = vld [vmem:[%s8 + $0x5c] sm:$0xf]
    %v1884 = vld [vmem:[%s8 + $0x60] sm:$0xf]
    %v1885 = vld [vmem:[%s8 + $0x64] sm:$0xf]
    %v1886 = vld [vmem:[%s8 + $0x68] sm:$0xf]
    %v1887 = vld [vmem:[%s8 + $0x6c] sm:$0xf]
    %v1888 = vld [vmem:[%s8 + $0x70] sm:$0xf]
    %v1889 = vld [vmem:[%s8 + $0x74] sm:$0xf]
    %v1890 = vld [vmem:[%s8 + $0x78] sm:$0xf]
    %v1891 = vld [vmem:[%s8 + $0x7c] sm:$0xf]
    %v1892 = vld [vmem:[%s8 + $0x80] sm:$0xf]
    %v1893 = vld [vmem:[%s8 + $0x84] sm:$0xf]
    %v1894 = vld [vmem:[%s8 + $0x88] sm:$0xf]
    %v1895 = vld [vmem:[%s8 + $0x8c] sm:$0xf]
    %v1896 = vld [vmem:[%s8 + $0x90] sm:$0xf]
    %v1897 = vld [vmem:[%s8 + $0x94] sm:$0xf]
    %v1898 = vld [vmem:[%s8 + $0x98] sm:$0xf]
    %v1899 = vld [vmem:[%s8 + $0x9c] sm:$0xf]
    %v1900 = vld [vmem:[%s8 + $0xa0] sm:$0xf]
    %v1901 = vld [vmem:[%s8 + $0xa4] sm:$0xf]
    %v1902 = vld [vmem:[%s8 + $0xa8] sm:$0xf]
    %v1903 = vld [vmem:[%s8 + $0xac] sm:$0xf]
    %v1904 = vld [vmem:[%s8 + $0xb0] sm:$0xf]
    %v1905 = vld [vmem:[%s8 + $0xb4] sm:$0xf]
    %v1906 = vld [vmem:[%s8 + $0xb8] sm:$0xf]
    %v1907 = vld [vmem:[%s8 + $0xbc] sm:$0xf]
    %v1908 = vld [vmem:[%s8 + $0xc0] sm:$0xf]
    %v1909 = vld [vmem:[%s8 + $0xc4] sm:$0xf]
    %v1910 = vld [vmem:[%s8 + $0xc8] sm:$0xf]
    %v1911 = vld [vmem:[%s8 + $0xcc] sm:$0xf]
    %v1912 = vld [vmem:[%s8 + $0xd0] sm:$0xf]
    %v1913 = vld [vmem:[%s8 + $0xd4] sm:$0xf]
    %v1914 = vld [vmem:[%s8 + $0xd8] sm:$0xf]
    %v1915 = vld [vmem:[%s8 + $0xdc] sm:$0xf]
    %v1916 = vld [vmem:[%s8 + $0xe0] sm:$0xf]
    %v1917 = vld [vmem:[%s8 + $0xe4] sm:$0xf]
    %v1918 = vld [vmem:[%s8 + $0xe8] sm:$0xf]
    %v1919 = vld [vmem:[%s8 + $0xec] sm:$0xf]
    %v1920 = vld [vmem:[%s8 + $0xf0] sm:$0xf]
    %v1921 = vld [vmem:[%s8 + $0xf4] sm:$0xf]
    %v1922 = vld [vmem:[%s8 + $0xf8] sm:$0xf]
    %v1923 = vld [vmem:[%s8 + $0xfc] sm:$0xf]
    %v1924 = vld [vmem:[%s8 + $0x100] sm:$0xf]
    %v1925 = vld [vmem:[%s8 + $0x104] sm:$0xf]
    %v1926 = vld [vmem:[%s8 + $0x108] sm:$0xf]
    %v1927 = vld [vmem:[%s8 + $0x10c] sm:$0xf]
    %v1928 = vld [vmem:[%s8 + $0x110] sm:$0xf]
    %v1929 = vld [vmem:[%s8 + $0x114] sm:$0xf]
    %v1930 = vld [vmem:[%s8 + $0x118] sm:$0xf]
    %v1931 = vld [vmem:[%s8 + $0x11c] sm:$0xf]
    %v1932 = vld [vmem:[%s8 + $0x120] sm:$0xf]
    %v1933 = vld [vmem:[%s8 + $0x124] sm:$0xf]
    %v1934 = vld [vmem:[%s8 + $0x128] sm:$0xf]
    %v1935 = vld [vmem:[%s8 + $0x12c] sm:$0xf]
    %v1936 = vld [vmem:[%s8 + $0x130] sm:$0xf]
    %v1937 = vld [vmem:[%s8 + $0x134] sm:$0xf]
    %v1938 = vld [vmem:[%s8 + $0x138] sm:$0xf]
    %v1939 = vld [vmem:[%s8 + $0x13c] sm:$0xf]
    %v1940 = vld [vmem:[%s8 + $0x140] sm:$0xf]
    %v1941 = vld [vmem:[%s8 + $0x144] sm:$0xf]
    %v1942 = vld [vmem:[%s8 + $0x148] sm:$0xf]
    %v1943 = vld [vmem:[%s8 + $0x14c] sm:$0xf]
    %v1944 = vld [vmem:[%s8 + $0x150] sm:$0xf]
    %v1945 = vld [vmem:[%s8 + $0x154] sm:$0xf]
    %v1946 = vld [vmem:[%s8 + $0x158] sm:$0xf]
    %v1947 = vld [vmem:[%s8 + $0x15c] sm:$0xf]
    %v1948 = vld [vmem:[%s8 + $0x160] sm:$0xf]
    %v1949 = vld [vmem:[%s8 + $0x164] sm:$0xf]
    %v1950 = vld [vmem:[%s8 + $0x168] sm:$0xf]
    %v1951 = vld [vmem:[%s8 + $0x16c] sm:$0xf]
    %v1952 = vld [vmem:[%s8 + $0x170] sm:$0xf]
    %v1953 = vld [vmem:[%s8 + $0x174] sm:$0xf]
    %v1954 = vld [vmem:[%s8 + $0x178] sm:$0xf]
    %v1955 = vld [vmem:[%s8 + $0x17c] sm:$0xf]
    %v1956 = vld [vmem:[%s8 + $0x180] sm:$0xf]
    %v1957 = vld [vmem:[%s8 + $0x184] sm:$0xf]
    %v1958 = vld [vmem:[%s8 + $0x188] sm:$0xf]
    %v1959 = vld [vmem:[%s8 + $0x18c] sm:$0xf]
    %v1960 = vld [vmem:[%s8 + $0x190] sm:$0xf]
    %v1961 = vld [vmem:[%s8 + $0x194] sm:$0xf]
    %v1962 = vld [vmem:[%s8 + $0x198] sm:$0xf]
    %v1963 = vld [vmem:[%s8 + $0x19c] sm:$0xf]
    %v1964 = vld [vmem:[%s8 + $0x1a0] sm:$0xf]
    %v1965 = vld [vmem:[%s8 + $0x1a4] sm:$0xf]
    %v1966 = vld [vmem:[%s8 + $0x1a8] sm:$0xf]
    %v1967 = vld [vmem:[%s8 + $0x1ac] sm:$0xf]
    %v1968 = vld [vmem:[%s8 + $0x1b0] sm:$0xf]
    %v1969 = vld [vmem:[%s8 + $0x1b4] sm:$0xf]
    %v1970 = vld [vmem:[%s8 + $0x1b8] sm:$0xf]
    %v1971 = vld [vmem:[%s8 + $0x1bc] sm:$0xf]
    %v1972 = vld [vmem:[%s8 + $0x1c0] sm:$0xf]
    %v1973 = vld [vmem:[%s8 + $0x1c4] sm:$0xf]
    %v1974 = vld [vmem:[%s8 + $0x1c8] sm:$0xf]
    %v1975 = vld [vmem:[%s8 + $0x1cc] sm:$0xf]
    %v1976 = vld [vmem:[%s8 + $0x1d0] sm:$0xf]
    %v1977 = vld [vmem:[%s8 + $0x1d4] sm:$0xf]
    %v1978 = vld [vmem:[%s8 + $0x1d8] sm:$0xf]
    %v1979 = vld [vmem:[%s8 + $0x1dc] sm:$0xf]
    %v1980 = vld [vmem:[%s8 + $0x1e0] sm:$0xf]
    %v1981 = vld [vmem:[%s8 + $0x1e4] sm:$0xf]
    %v1982 = vld [vmem:[%s8 + $0x1e8] sm:$0xf]
    %v1983 = vld [vmem:[%s8 + $0x1ec] sm:$0xf]
    %v1984 = vld [vmem:[%s8 + $0x1f0] sm:$0xf]
    %v1985 = vld [vmem:[%s8 + $0x1f4] sm:$0xf]
    %v1986 = vld [vmem:[%s8 + $0x1f8] sm:$0xf]
    %v1987 = vld [vmem:[%s8 + $0x1fc] sm:$0xf]
    %v2116 = vunpack.c.l.b16 %v1860
    %v2117 = vunpack.c.l.b16 %v1861
    %v2118 = vunpack.c.l.b16 %v1862
    %v2119 = vunpack.c.l.b16 %v1863
    %v2120 = vunpack.c.l.b16 %v1864
    %v2121 = vunpack.c.l.b16 %v1865
    %v2122 = vunpack.c.l.b16 %v1866
    %v2123 = vunpack.c.l.b16 %v1867
    %v2124 = vunpack.c.l.b16 %v1868
    %v2125 = vunpack.c.l.b16 %v1869
    %v2126 = vunpack.c.l.b16 %v1870
    %v2127 = vunpack.c.l.b16 %v1871
    %v2128 = vunpack.c.l.b16 %v1872
    %v2129 = vunpack.c.l.b16 %v1873
    %v2130 = vunpack.c.l.b16 %v1874
    %v2131 = vunpack.c.l.b16 %v1875
    %v2132 = vunpack.c.l.b16 %v1876
    %v2133 = vunpack.c.l.b16 %v1877
    %v2134 = vunpack.c.l.b16 %v1878
    %v2135 = vunpack.c.l.b16 %v1879
    %v2136 = vunpack.c.l.b16 %v1880
    %v2137 = vunpack.c.l.b16 %v1881
    %v2138 = vunpack.c.l.b16 %v1882
    %v2139 = vunpack.c.l.b16 %v1883
    %v2140 = vunpack.c.l.b16 %v1884
    %v2141 = vunpack.c.l.b16 %v1885
    %v2142 = vunpack.c.l.b16 %v1886
    %v2143 = vunpack.c.l.b16 %v1887
    %v2144 = vunpack.c.l.b16 %v1888
    %v2145 = vunpack.c.l.b16 %v1889
    %v2146 = vunpack.c.l.b16 %v1890
    %v2147 = vunpack.c.l.b16 %v1891
    %v2148 = vunpack.c.l.b16 %v1892
    %v2149 = vunpack.c.l.b16 %v1893
    %v2150 = vunpack.c.l.b16 %v1894
    %v2151 = vunpack.c.l.b16 %v1895
    %v2152 = vunpack.c.l.b16 %v1896
    %v2153 = vunpack.c.l.b16 %v1897
    %v2154 = vunpack.c.l.b16 %v1898
    %v2155 = vunpack.c.l.b16 %v1899
    %v2156 = vunpack.c.l.b16 %v1900
    %v2157 = vunpack.c.l.b16 %v1901
    %v2158 = vunpack.c.l.b16 %v1902
    %v2159 = vunpack.c.l.b16 %v1903
    %v2160 = vunpack.c.l.b16 %v1904
    %v2161 = vunpack.c.l.b16 %v1905
    %v2162 = vunpack.c.l.b16 %v1906
    %v2163 = vunpack.c.l.b16 %v1907
    %v2164 = vunpack.c.l.b16 %v1908
    %v2165 = vunpack.c.l.b16 %v1909
    %v2166 = vunpack.c.l.b16 %v1910
    %v2167 = vunpack.c.l.b16 %v1911
    %v2168 = vunpack.c.l.b16 %v1912
    %v2169 = vunpack.c.l.b16 %v1913
    %v2170 = vunpack.c.l.b16 %v1914
    %v2171 = vunpack.c.l.b16 %v1915
    %v2172 = vunpack.c.l.b16 %v1916
    %v2173 = vunpack.c.l.b16 %v1917
    %v2174 = vunpack.c.l.b16 %v1918
    %v2175 = vunpack.c.l.b16 %v1919
    %v2176 = vunpack.c.l.b16 %v1920
    %v2177 = vunpack.c.l.b16 %v1921
    %v2178 = vunpack.c.l.b16 %v1922
    %v2179 = vunpack.c.l.b16 %v1923
    %v2180 = vunpack.c.l.b16 %v1924
    %v2181 = vunpack.c.l.b16 %v1925
    %v2182 = vunpack.c.l.b16 %v1926
    %v2183 = vunpack.c.l.b16 %v1927
    %v2184 = vunpack.c.l.b16 %v1928
    %v2185 = vunpack.c.l.b16 %v1929
    %v2186 = vunpack.c.l.b16 %v1930
    %v2187 = vunpack.c.l.b16 %v1931
    %v2188 = vunpack.c.l.b16 %v1932
    %v2189 = vunpack.c.l.b16 %v1933
    %v2190 = vunpack.c.l.b16 %v1934
    %v2191 = vunpack.c.l.b16 %v1935
    %v2192 = vunpack.c.l.b16 %v1936
    %v2193 = vunpack.c.l.b16 %v1937
    %v2194 = vunpack.c.l.b16 %v1938
    %v2195 = vunpack.c.l.b16 %v1939
    %v2196 = vunpack.c.l.b16 %v1940
    %v2197 = vunpack.c.l.b16 %v1941
    %v2198 = vunpack.c.l.b16 %v1942
    %v2199 = vunpack.c.l.b16 %v1943
    %v2200 = vunpack.c.l.b16 %v1944
    %v2201 = vunpack.c.l.b16 %v1945
    %v2202 = vunpack.c.l.b16 %v1946
    %v2203 = vunpack.c.l.b16 %v1947
    %v2204 = vunpack.c.l.b16 %v1948
    %v2205 = vunpack.c.l.b16 %v1949
    %v2206 = vunpack.c.l.b16 %v1950
    %v2207 = vunpack.c.l.b16 %v1951
    %v2208 = vunpack.c.l.b16 %v1952
    %v2209 = vunpack.c.l.b16 %v1953
    %v2210 = vunpack.c.l.b16 %v1954
    %v2211 = vunpack.c.l.b16 %v1955
    %v2212 = vunpack.c.l.b16 %v1956
    %v2213 = vunpack.c.l.b16 %v1957
    %v2214 = vunpack.c.l.b16 %v1958
    %v2215 = vunpack.c.l.b16 %v1959
    %v2216 = vunpack.c.l.b16 %v1960
    %v2217 = vunpack.c.l.b16 %v1961
    %v2218 = vunpack.c.l.b16 %v1962
    %v2219 = vunpack.c.l.b16 %v1963
    %v2220 = vunpack.c.l.b16 %v1964
    %v2221 = vunpack.c.l.b16 %v1965
    %v2222 = vunpack.c.l.b16 %v1966
    %v2223 = vunpack.c.l.b16 %v1967
    %v2224 = vunpack.c.l.b16 %v1968
    %v2225 = vunpack.c.l.b16 %v1969
    %v2226 = vunpack.c.l.b16 %v1970
    %v2227 = vunpack.c.l.b16 %v1971
    %v2228 = vunpack.c.l.b16 %v1972
    %v2229 = vunpack.c.l.b16 %v1973
    %v2230 = vunpack.c.l.b16 %v1974
    %v2231 = vunpack.c.l.b16 %v1975
    %v2232 = vunpack.c.l.b16 %v1976
    %v2233 = vunpack.c.l.b16 %v1977
    %v2234 = vunpack.c.l.b16 %v1978
    %v2235 = vunpack.c.l.b16 %v1979
    %v2236 = vunpack.c.l.b16 %v1980
    %v2237 = vunpack.c.l.b16 %v1981
    %v2238 = vunpack.c.l.b16 %v1982
    %v2239 = vunpack.c.l.b16 %v1983
    %v2240 = vunpack.c.l.b16 %v1984
    %v2241 = vunpack.c.l.b16 %v1985
    %v2242 = vunpack.c.l.b16 %v1986
    %v2243 = vunpack.c.l.b16 %v1987
    %v2244 = vpack.c.b16 %v2117, %v2116
    %v2245 = vpack.c.b16 %v2119, %v2118
    %v2246 = vpack.c.b16 %v2121, %v2120
    %v2247 = vpack.c.b16 %v2123, %v2122
    %v2248 = vpack.c.b16 %v2125, %v2124
    %v2249 = vpack.c.b16 %v2127, %v2126
    %v2250 = vpack.c.b16 %v2129, %v2128
    %v2251 = vpack.c.b16 %v2131, %v2130
    %v2252 = vpack.c.b16 %v2133, %v2132
    %v2253 = vpack.c.b16 %v2135, %v2134
    %v2254 = vpack.c.b16 %v2137, %v2136
    %v2255 = vpack.c.b16 %v2139, %v2138
    %v2256 = vpack.c.b16 %v2141, %v2140
    %v2257 = vpack.c.b16 %v2143, %v2142
    %v2258 = vpack.c.b16 %v2145, %v2144
    %v2259 = vpack.c.b16 %v2147, %v2146
    %v2260 = vpack.c.b16 %v2149, %v2148
    %v2261 = vpack.c.b16 %v2151, %v2150
    %v2262 = vpack.c.b16 %v2153, %v2152
    %v2263 = vpack.c.b16 %v2155, %v2154
    %v2264 = vpack.c.b16 %v2157, %v2156
    %v2265 = vpack.c.b16 %v2159, %v2158
    %v2266 = vpack.c.b16 %v2161, %v2160
    %v2267 = vpack.c.b16 %v2163, %v2162
    %v2268 = vpack.c.b16 %v2165, %v2164
    %v2269 = vpack.c.b16 %v2167, %v2166
    %v2270 = vpack.c.b16 %v2169, %v2168
    %v2271 = vpack.c.b16 %v2171, %v2170
    %v2272 = vpack.c.b16 %v2173, %v2172
    %v2273 = vpack.c.b16 %v2175, %v2174
    %v2274 = vpack.c.b16 %v2177, %v2176
    %v2275 = vpack.c.b16 %v2179, %v2178
    %v2276 = vpack.c.b16 %v2181, %v2180
    %v2277 = vpack.c.b16 %v2183, %v2182
    %v2278 = vpack.c.b16 %v2185, %v2184
    %v2279 = vpack.c.b16 %v2187, %v2186
    %v2280 = vpack.c.b16 %v2189, %v2188
    %v2281 = vpack.c.b16 %v2191, %v2190
    %v2282 = vpack.c.b16 %v2193, %v2192
    %v2283 = vpack.c.b16 %v2195, %v2194
    %v2284 = vpack.c.b16 %v2197, %v2196
    %v2285 = vpack.c.b16 %v2199, %v2198
    %v2286 = vpack.c.b16 %v2201, %v2200
    %v2287 = vpack.c.b16 %v2203, %v2202
    %v2288 = vpack.c.b16 %v2205, %v2204
    %v2289 = vpack.c.b16 %v2207, %v2206
    %v2290 = vpack.c.b16 %v2209, %v2208
    %v2291 = vpack.c.b16 %v2211, %v2210
    %v2292 = vpack.c.b16 %v2213, %v2212
    %v2293 = vpack.c.b16 %v2215, %v2214
    %v2294 = vpack.c.b16 %v2217, %v2216
    %v2295 = vpack.c.b16 %v2219, %v2218
    %v2296 = vpack.c.b16 %v2221, %v2220
    %v2297 = vpack.c.b16 %v2223, %v2222
    %v2298 = vpack.c.b16 %v2225, %v2224
    %v2299 = vpack.c.b16 %v2227, %v2226
    %v2300 = vpack.c.b16 %v2229, %v2228
    %v2301 = vpack.c.b16 %v2231, %v2230
    %v2302 = vpack.c.b16 %v2233, %v2232
    %v2303 = vpack.c.b16 %v2235, %v2234
    %v2304 = vpack.c.b16 %v2237, %v2236
    %v2305 = vpack.c.b16 %v2239, %v2238
    %v2306 = vpack.c.b16 %v2241, %v2240
    %v2307 = vpack.c.b16 %v2243, %v2242
    %2372 = vmatprep.subr.bf16.mxu0 0
    %2373 = vmatpush1.bf16.msra.mxu0 %v2244
    %2374 = vmatprep.subr.bf16.mxu0 0
    %2375 = vmatpush1.bf16.msra.mxu0 %v2245
    %2376 = vmatprep.subr.bf16.mxu0 0
    %2377 = vmatpush1.bf16.msra.mxu0 %v2246
    %2378 = vmatprep.subr.bf16.mxu0 0
    %2379 = vmatpush1.bf16.msra.mxu0 %v2247
    %2380 = vmatprep.subr.bf16.mxu0 0
    %2381 = vmatpush1.bf16.msra.mxu0 %v2248
    %2382 = vmatprep.subr.bf16.mxu0 0
    %2383 = vmatpush1.bf16.msra.mxu0 %v2249
    %2384 = vmatprep.subr.bf16.mxu0 0
    %2385 = vmatpush1.bf16.msra.mxu0 %v2250
    %2386 = vmatprep.subr.bf16.mxu0 0
    %2387 = vmatpush1.bf16.msra.mxu0 %v2251
    %2388 = vmatprep.subr.bf16.mxu0 0
    %2389 = vmatpush1.bf16.msra.mxu0 %v2252
    %2390 = vmatprep.subr.bf16.mxu0 0
    %2391 = vmatpush1.bf16.msra.mxu0 %v2253
    %2392 = vmatprep.subr.bf16.mxu0 0
    %2393 = vmatpush1.bf16.msra.mxu0 %v2254
    %2394 = vmatprep.subr.bf16.mxu0 0
    %2395 = vmatpush1.bf16.msra.mxu0 %v2255
    %2396 = vmatprep.subr.bf16.mxu0 0
    %2397 = vmatpush1.bf16.msra.mxu0 %v2256
    %2398 = vmatprep.subr.bf16.mxu0 0
    %2399 = vmatpush1.bf16.msra.mxu0 %v2257
    %2400 = vmatprep.subr.bf16.mxu0 0
    %2401 = vmatpush1.bf16.msra.mxu0 %v2258
    %2402 = vmatprep.subr.bf16.mxu0 0
    %2403 = vmatpush1.bf16.msra.mxu0 %v2259
    %2404 = vmatprep.mubr.bf16.mxu0 %v1853
    %2405 = vmatmul.mubr.bf16.gmra.mrb[0].mxu0 %v1852
    %v2406 = vpop.f32.mrb[0].mxu0
    %v2407 = vadd.f32 0.0, %v2406
    %v2408 = vpop.f32.mrb[0].mxu0
    %v2409 = vpop.f32.mrb[0].mxu0
    %v2410 = vadd.f32 0.0, %v2409
    %v2411 = vpop.f32.mrb[0].mxu0
    %2412 = vdwg.mxu0
    %2413 = vmatprep.subr.bf16.mxu0 0
    %2414 = vmatpush1.bf16.msra.mxu0 %v2260
    %2415 = vmatprep.subr.bf16.mxu0 0
    %2416 = vmatpush1.bf16.msra.mxu0 %v2261
    %2417 = vmatprep.subr.bf16.mxu0 0
    %2418 = vmatpush1.bf16.msra.mxu0 %v2262
    %2419 = vmatprep.subr.bf16.mxu0 0
    %2420 = vmatpush1.bf16.msra.mxu0 %v2263
    %2421 = vmatprep.subr.bf16.mxu0 0
    %2422 = vmatpush1.bf16.msra.mxu0 %v2264
    %2423 = vmatprep.subr.bf16.mxu0 0
    %2424 = vmatpush1.bf16.msra.mxu0 %v2265
    %2425 = vmatprep.subr.bf16.mxu0 0
    %2426 = vmatpush1.bf16.msra.mxu0 %v2266
    %2427 = vmatprep.subr.bf16.mxu0 0
    %2428 = vmatpush1.bf16.msra.mxu0 %v2267
    %2429 = vmatprep.subr.bf16.mxu0 0
    %2430 = vmatpush1.bf16.msra.mxu0 %v2268
    %2431 = vmatprep.subr.bf16.mxu0 0
    %2432 = vmatpush1.bf16.msra.mxu0 %v2269
    %2433 = vmatprep.subr.bf16.mxu0 0
    %2434 = vmatpush1.bf16.msra.mxu0 %v2270
    %2435 = vmatprep.subr.bf16.mxu0 0
    %2436 = vmatpush1.bf16.msra.mxu0 %v2271
    %2437 = vmatprep.subr.bf16.mxu0 0
    %2438 = vmatpush1.bf16.msra.mxu0 %v2272
    %2439 = vmatprep.subr.bf16.mxu0 0
    %2440 = vmatpush1.bf16.msra.mxu0 %v2273
    %2441 = vmatprep.subr.bf16.mxu0 0
    %2442 = vmatpush1.bf16.msra.mxu0 %v2274
    %2443 = vmatprep.subr.bf16.mxu0 0
    %2444 = vmatpush1.bf16.msra.mxu0 %v2275
    %2445 = vmatprep.mubr.bf16.mxu0 %v1855
    %2446 = vmatmul.mubr.bf16.gmra.mrb[0].mxu0 %v1854
    %v2447 = vpop.f32.mrb[0].mxu0
    %v2448 = vadd.f32 %v2407, %v2447
    %v2449 = vpop.f32.mrb[0].mxu0
    %v2450 = vpop.f32.mrb[0].mxu0
    %v2451 = vadd.f32 %v2410, %v2450
    %v2452 = vpop.f32.mrb[0].mxu0
    %2453 = vdwg.mxu0
    %2454 = vmatprep.subr.bf16.mxu0 0
    %2455 = vmatpush1.bf16.msra.mxu0 %v2276
    %2456 = vmatprep.subr.bf16.mxu0 0
    %2457 = vmatpush1.bf16.msra.mxu0 %v2277
    %2458 = vmatprep.subr.bf16.mxu0 0
    %2459 = vmatpush1.bf16.msra.mxu0 %v2278
    %2460 = vmatprep.subr.bf16.mxu0 0
    %2461 = vmatpush1.bf16.msra.mxu0 %v2279
    %2462 = vmatprep.subr.bf16.mxu0 0
    %2463 = vmatpush1.bf16.msra.mxu0 %v2280
    %2464 = vmatprep.subr.bf16.mxu0 0
    %2465 = vmatpush1.bf16.msra.mxu0 %v2281
    %2466 = vmatprep.subr.bf16.mxu0 0
    %2467 = vmatpush1.bf16.msra.mxu0 %v2282
    %2468 = vmatprep.subr.bf16.mxu0 0
    %2469 = vmatpush1.bf16.msra.mxu0 %v2283
    %2470 = vmatprep.subr.bf16.mxu0 0
    %2471 = vmatpush1.bf16.msra.mxu0 %v2284
    %2472 = vmatprep.subr.bf16.mxu0 0
    %2473 = vmatpush1.bf16.msra.mxu0 %v2285
    %2474 = vmatprep.subr.bf16.mxu0 0
    %2475 = vmatpush1.bf16.msra.mxu0 %v2286
    %2476 = vmatprep.subr.bf16.mxu0 0
    %2477 = vmatpush1.bf16.msra.mxu0 %v2287
    %2478 = vmatprep.subr.bf16.mxu0 0
    %2479 = vmatpush1.bf16.msra.mxu0 %v2288
    %2480 = vmatprep.subr.bf16.mxu0 0
    %2481 = vmatpush1.bf16.msra.mxu0 %v2289
    %2482 = vmatprep.subr.bf16.mxu0 0
    %2483 = vmatpush1.bf16.msra.mxu0 %v2290
    %2484 = vmatprep.subr.bf16.mxu0 0
    %2485 = vmatpush1.bf16.msra.mxu0 %v2291
    %2486 = vmatprep.mubr.bf16.mxu0 %v1857
    %2487 = vmatmul.mubr.bf16.gmra.mrb[0].mxu0 %v1856
    %v2488 = vpop.f32.mrb[0].mxu0
    %v2489 = vadd.f32 %v2448, %v2488
    %v2490 = vpop.f32.mrb[0].mxu0
    %v2491 = vpop.f32.mrb[0].mxu0
    %v2492 = vadd.f32 %v2451, %v2491
    %v2493 = vpop.f32.mrb[0].mxu0
    %2494 = vdwg.mxu0
    %2495 = vmatprep.subr.bf16.mxu0 0
    %2496 = vmatpush1.bf16.msra.mxu0 %v2292
    %2497 = vmatprep.subr.bf16.mxu0 0
    %2498 = vmatpush1.bf16.msra.mxu0 %v2293
    %2499 = vmatprep.subr.bf16.mxu0 0
    %2500 = vmatpush1.bf16.msra.mxu0 %v2294
    %2501 = vmatprep.subr.bf16.mxu0 0
    %2502 = vmatpush1.bf16.msra.mxu0 %v2295
    %2503 = vmatprep.subr.bf16.mxu0 0
    %2504 = vmatpush1.bf16.msra.mxu0 %v2296
    %2505 = vmatprep.subr.bf16.mxu0 0
    %2506 = vmatpush1.bf16.msra.mxu0 %v2297
    %2507 = vmatprep.subr.bf16.mxu0 0
    %2508 = vmatpush1.bf16.msra.mxu0 %v2298
    %2509 = vmatprep.subr.bf16.mxu0 0
    %2510 = vmatpush1.bf16.msra.mxu0 %v2299
    %2511 = vmatprep.subr.bf16.mxu0 0
    %2512 = vmatpush1.bf16.msra.mxu0 %v2300
    %2513 = vmatprep.subr.bf16.mxu0 0
    %2514 = vmatpush1.bf16.msra.mxu0 %v2301
    %2515 = vmatprep.subr.bf16.mxu0 0
    %2516 = vmatpush1.bf16.msra.mxu0 %v2302
    %2517 = vmatprep.subr.bf16.mxu0 0
    %2518 = vmatpush1.bf16.msra.mxu0 %v2303
    %2519 = vmatprep.subr.bf16.mxu0 0
    %2520 = vmatpush1.bf16.msra.mxu0 %v2304
    %2521 = vmatprep.subr.bf16.mxu0 0
    %2522 = vmatpush1.bf16.msra.mxu0 %v2305
    %2523 = vmatprep.subr.bf16.mxu0 0
    %2524 = vmatpush1.bf16.msra.mxu0 %v2306
    %2525 = vmatprep.subr.bf16.mxu0 0
    %2526 = vmatpush1.bf16.msra.mxu0 %v2307
    %2527 = vmatprep.mubr.bf16.mxu0 %v1859
    %2528 = vmatmul.mubr.bf16.gmra.mrb[0].mxu0 %v1858
    %v2529 = vpop.f32.mrb[0].mxu0
    %v2530 = vadd.f32 %v2489, %v2529
    %v2531 = vpop.f32.mrb[0].mxu0
    %v2532 = vpop.f32.mrb[0].mxu0
    %v2533 = vadd.f32 %v2492, %v2532
    %v2534 = vpop.f32.mrb[0].mxu0
    %2535 = vdwg.mxu0
    %v2536 = vadd.f32 %v571, %v2530
    %v2537 = vadd.f32 %v572, %v2533
    %2538 = vst.msk [vmem:[#allocation2] sm:$0xff] %vm60, %v2536
    %2539 = vst.msk [vmem:[#allocation2 + $0x8] sm:$0xff] %vm60, %v2537
    // Predicated region
    $region62: #{tpu_custom_call.1} parent=1 // pred_check
      _
    $region63: #{tpu_custom_call.1} parent=1 // pred_check_branch
      %2541 = sbr.rel (0) target = $region65
    $region64: #{tpu_custom_call.1} parent=1 // pred_region
      %s2543 = ssub.s32 256, 256
      %2544 = vsyncadd [#allocation3], %s2543
      %s2545 = sshll.u32 [#allocation2], 4
      %s2546 = int_to_ptr.vmem [resolvable:$true] %s2545
      %2551 = dma.vmem_to_hbm [thread:$0]  %s2546, 256, %s15, [#allocation3], 128, 128, 8
    $region65: #{tpu_custom_call.1} parent=1 // pred_fallthru
      _
    // Predicated region
    $region66: #{tpu_custom_call.1} parent=1 // pred_check
      _
    $region67: #{tpu_custom_call.1} parent=1 // pred_check_branch
      %2553 = sbr.rel (0) target = $region69
    $region68: #{tpu_custom_call.1} parent=1 // pred_region
      %s2555 = ssub.s32 16, 16
      %2556 = vsyncadd [#allocation5], %s2555
      %s2558 = sshll.u32 [#allocation4], 4
      %s2559 = int_to_ptr.vmem [resolvable:$true] %s2558
      %2561 = dma.vmem_to_hbm [thread:$0]  %s2559, 16, %s16, [#allocation5]
    $region69: #{tpu_custom_call.1} parent=1 // pred_fallthru
      _
    // Predicated region
    $region70: #{tpu_custom_call.1} parent=1 // pred_check
      _
    $region71: #{tpu_custom_call.1} parent=1 // pred_check_branch
      %2563 = sbr.rel (0) target = $region73
    $region72: #{tpu_custom_call.1} parent=1 // pred_region
      %2564 = dma.done [#allocation3], 256
    $region73: #{tpu_custom_call.1} parent=1 // pred_fallthru
      _
    // Predicated region
    $region74: #{tpu_custom_call.1} parent=1 // pred_check
      _
    $region75: #{tpu_custom_call.1} parent=1 // pred_check_branch
      %2566 = sbr.rel (0) target = $region77
    $region76: #{tpu_custom_call.1} parent=1 // pred_region
      %2567 = dma.done [#allocation5], 16
    $region77: #{tpu_custom_call.1} parent=1 // pred_fallthru
      _
    %2568 = vsyncpa [#allocation3], 1
    %2569 = vsyncpa [#allocation5], 1

</llo_original>
